<compile_context>
chip_gen: v6e
topology: v6e:2x2x1
jax: 0.10.0
libtpu: 0.0.40
codegen_flags: <defaults>
</compile_context>

<pallas_src>
import functools

import jax
import jax.numpy as jnp
from jax.experimental import pallas as pl
from jax.experimental.pallas import tpu as pltpu


def _dense_block_kernel(*refs, K, H, W, c0, growth, num_layers):
    """Fused DenseBlock forward for one batch element (flat CHW layout).

    refs layout:
      refs[0]                      : (c0, H*W) f32                input channels
      refs[1+2l], refs[2+2l]       : (growth, K*K*c_l) bf16, (growth, 1) f32
      refs[1+2L]                   : (c_final, H*W) f32           output block
      refs[2+2L]                   : (c_last, halo_len) bf16      flat halo map (VMEM)
      refs[3+2L]                   : (K*K*c_last, H*W) bf16       im2col rows   (VMEM)
    """
    x_ref = refs[0]
    layer_refs = [(refs[1 + 2 * l], refs[2 + 2 * l]) for l in range(num_layers)]
    o_ref = refs[1 + 2 * num_layers]
    xg_ref = refs[2 + 2 * num_layers]
    pm_ref = refs[3 + 2 * num_layers]

    S = H * W
    KK = K * K
    p = K // 2
    interior = p * (W + 1)          # flat-halo index of pixel (0, 0)

    # Lane-column index, hoisted once; used only for the x-reflection selects.
    col = jax.lax.broadcasted_iota(jnp.int32, (1, S), 1) % W

    def append_block(v_bf16, lo, hi):
        """Add channels [lo, hi) to the halo buffer and append their im2col rows."""
        nb = hi - lo
        # Interior pixels of the halo buffer (one lane-dense store).
        xg_ref[lo:hi, interior:interior + S] = v_bf16
        # Ghost rows = reflection along H, copied in-VMEM (tiny (nb, W) copies).
        for j in range(p):
            src_t = p + (1 + j + p) * W            # row  1+j
            dst_t = p + (p - 1 - j) * W            # row -(1+j)
            xg_ref[lo:hi, dst_t:dst_t + W] = xg_ref[lo:hi, src_t:src_t + W]
            src_b = p + (H - 2 - j + p) * W        # row H-2-j
            dst_b = p + (H + p + j) * W            # row H+j
            xg_ref[lo:hi, dst_b:dst_b + W] = xg_ref[lo:hi, src_b:src_b + W]
        # im2col rows for this channel block: row = lo*KK + (dy*K+dx)*nb + ch.
        base = lo * KK
        for dy in range(K):
            # The K dx-taps of one dy are lane-shifted slices of the halo buffer.
            slabs = [xg_ref[lo:hi, dy * W + dx:dy * W + dx + S] for dx in range(K)]
            for dx in range(K):
                tap = slabs[dx]
                # x-reflection fixups (ReflectionPad2d along W): at the p edge
                # columns the shifted read is out of range; substitute the value
                # of the mirrored tap (same row, reflected column).
                for xe in range(p):
                    if dx < p - xe:                 # left edge, column xe
                        tap = jnp.where(col == xe,
                                        slabs[2 * p - 2 * xe - dx], tap)
                    if dx > p + xe:                 # right edge, column W-1-xe
                        tap = jnp.where(col == W - 1 - xe,
                                        slabs[2 * xe + 2 * p - dx], tap)
                r0 = base + (dy * K + dx) * nb
                pm_ref[r0:r0 + nb, :] = tap         # lane-dense (nb, H*W) store

    # Seed: the input channels are both the first output channels and the
    # first im2col channel block.
    x0 = x_ref[...]
    o_ref[0:c0, :] = x0
    append_block(x0.astype(xg_ref.dtype), 0, c0)

    c = c0
    for li, (w_ref, b_ref) in enumerate(layer_refs):
        # One deep MXU matmul per layer: (growth, K*K*c) x (K*K*c, H*W).
        y = jnp.dot(w_ref[...], pm_ref[0:KK * c, :],
                    preferred_element_type=jnp.float32)
        y = jnp.maximum(y + b_ref[...], 0.0)        # bias + ReLU, f32 epilogue
        o_ref[c:c + growth, :] = y                  # dense "concat" (lane-dense)
        if li + 1 < num_layers:                     # last layer feeds no further conv
            append_block(y.astype(xg_ref.dtype), c, c + growth)
        c += growth


def dense_block(x_nchw, params, kernel_size):
    """Full DenseBlock forward. Input/output NCHW (as in PyTorch), stride=1."""
    N, c0, H, W = x_nchw.shape
    K = kernel_size
    assert K % 2 == 1, "DenseBlock requires an odd kernel_size with stride 1"
    p = K // 2
    S = H * W
    KK = K * K
    num_layers = len(params)
    growth = params[0][0].shape[-1]
    c_final = c0 + num_layers * growth
    c_last = c0 + (num_layers - 1) * growth        # widest conv input channels
    halo_len = (H + 2 * p) * W + 2 * p

    # NCHW -> (N, C, H*W): metadata-only reshape, no transpose / HBM round trip.
    x_flat = x_nchw.reshape(N, c0, S).astype(jnp.float32)

    # Channel-block boundaries of the growing concatenated feature map.
    bounds = [0, c0] + [c0 + growth * (j + 1) for j in range(num_layers - 1)]

    flat_args = []
    in_specs = [pl.BlockSpec((None, c0, S), lambda n: (n, 0, 0))]
    flops = 0
    bytes_accessed = x_flat.size * 4 + N * c_final * S * 4
    c = c0
    for l, (w, b) in enumerate(params):
        cout = w.shape[-1]
        assert w.shape == (K, K, c, cout) and cout == growth
        # Permute weight rows into the append-only, channel-block-major im2col
        # row order: per block [lo, hi) the rows run (dy, dx, ch).  Free in XLA.
        pieces = [
            w[:, :, bounds[bk]:bounds[bk + 1], :]
            .reshape(KK * (bounds[bk + 1] - bounds[bk]), cout)
            for bk in range(l + 1)
        ]
        w_t = jnp.concatenate(pieces, axis=0).T.astype(jnp.bfloat16)  # (cout, KK*c)
        b_col = b.reshape(cout, 1).astype(jnp.float32)
        flat_args += [w_t, b_col]
        in_specs.append(pl.BlockSpec((cout, KK * c), lambda n: (0, 0)))
        in_specs.append(pl.BlockSpec((cout, 1), lambda n: (0, 0)))
        flops += 2 * N * S * KK * c * cout
        bytes_accessed += w_t.size * 2 + b_col.size * 4
        c += cout

    kernel = functools.partial(_dense_block_kernel, K=K, H=H, W=W, c0=c0,
                               growth=growth, num_layers=num_layers)

    # Explicit VMEM budget: double-buffered in/out blocks + weights + scratches.
    vmem_bytes = 2 * (c0 * S * 4 + c_final * S * 4)
    vmem_bytes += 2 * sum(int(a.size) * a.dtype.itemsize for a in flat_args)
    vmem_bytes += c_last * halo_len * 2 + KK * c_last * S * 2
    vmem_limit = int(min(max(2 * vmem_bytes + (4 << 20), 16 << 20), 100 << 20))

    out_flat = pl.pallas_call(
        kernel,
        out_shape=jax.ShapeDtypeStruct((N, c_final, S), jnp.float32),
        grid=(N,),
        in_specs=in_specs,
        out_specs=pl.BlockSpec((None, c_final, S), lambda n: (n, 0, 0)),
        scratch_shapes=[
            # flat halo feature map (ghost rows/lanes for reflection), bf16
            pltpu.VMEM((c_last, halo_len), jnp.bfloat16),
            # append-only im2col patch matrix, H*W in lanes, bf16
            pltpu.VMEM((KK * c_last, S), jnp.bfloat16),
        ],
        compiler_params=pltpu.CompilerParams(
            dimension_semantics=("parallel",),
            vmem_limit_bytes=vmem_limit),
        cost_estimate=pl.CostEstimate(flops=int(flops), transcendentals=0,
                                      bytes_accessed=int(bytes_accessed)),
    )(x_flat, *flat_args)

    # (N, c_final, H*W) -> NCHW: metadata-only reshape.
    return out_flat.reshape(N, c_final, H, W)


def dense_block_reference(x_nchw, params, kernel_size):
    """Pure-JAX f32 reference (reflection pad -> conv -> ReLU -> concat) x3."""
    K = kernel_size
    p = K // 2
    x = jnp.transpose(x_nchw, (0, 2, 3, 1))
    for (w, b) in params:
        xp = jnp.pad(x, ((0, 0), (p, p), (p, p), (0, 0)), mode="reflect")
        y = jax.lax.conv_general_dilated(
            xp, w, window_strides=(1, 1), padding="VALID",
            dimension_numbers=("NHWC", "HWIO", "NHWC"),
            precision=jax.lax.Precision.HIGHEST)
        y = jnp.maximum(y + b.reshape(1, 1, 1, -1), 0.0)
        x = jnp.concatenate([x, y], axis=-1)
    return jnp.transpose(x, (0, 3, 1, 2))


def init_params(key, in_channels, kernel_size, out_channels_def=16, num_layers=3):
    """Deterministic synthetic init for the 3 DenseConv2d layers.

    Weights are (K, K, Cin, Cout); to load real PyTorch weights
    (Cout, Cin, K, K) transpose them with (2, 3, 1, 0).
    """
    params = []
    cin = in_channels
    for _ in range(num_layers):
        k_w, k_b, key = jax.random.split(key, 3)
        fan_in = cin * kernel_size * kernel_size
        scale = 1.0 / jnp.sqrt(fan_in)
        w = jax.random.uniform(
            k_w, (kernel_size, kernel_size, cin, out_channels_def),
            jnp.float32, -scale, scale)
        b = jax.random.uniform(
            k_b, (1, out_channels_def), jnp.float32, -scale, scale)
        params.append((w, b))
        cin += out_channels_def
    return params


if __name__ == "__main__":
    key = jax.random.PRNGKey(0)
    k_x, k_p = jax.random.split(key)

    N, C, H, W = 2, 4, 16, 16
    kernel_size = 3  # stride is 1 (required for the dense concat to be shape-valid)

    x = jax.random.normal(k_x, (N, C, H, W), jnp.float32)
    params = init_params(k_p, C, kernel_size)

    out = jax.block_until_ready(dense_block(x, params, kernel_size))

    expected_channels = C + 3 * 16
    assert out.shape == (N, expected_channels, H, W), out.shape

    ref = jax.block_until_ready(dense_block_reference(x, params, kernel_size))
    max_err = float(jnp.max(jnp.abs(out - ref)))
    assert jnp.allclose(out, ref, atol=2e-2, rtol=2e-2), max_err

    print("KERNEL_OK")
</pallas_src>

<mosaic_0001>
module attributes {stable_mosaic.version = 11 : i64} {
  func.func @_dense_block_kernel(%arg0: i32, %arg1: memref<1x4x256xf32, #tpu.memory_space<vmem>>, %arg2: memref<16x36xbf16, #tpu.memory_space<vmem>>, %arg3: memref<16x1xf32, #tpu.memory_space<vmem>>, %arg4: memref<16x180xbf16, #tpu.memory_space<vmem>>, %arg5: memref<16x1xf32, #tpu.memory_space<vmem>>, %arg6: memref<16x324xbf16, #tpu.memory_space<vmem>>, %arg7: memref<16x1xf32, #tpu.memory_space<vmem>>, %arg8: memref<1x52x256xf32, #tpu.memory_space<vmem>>, %arg9: memref<36x290xbf16, #tpu.memory_space<vmem>>, %arg10: memref<324x256xbf16, #tpu.memory_space<vmem>>) attributes {dimension_semantics = [#tpu.dimension_semantics<parallel>], iteration_bounds = array<i64: 2>, scalar_prefetch = 0 : i64, scratch_operands = 2 : i64, tpu.core_type = #tpu.core_type<tc>, window_params = [{transform_indices = @transform_0, window_bounds = array<i64: 1, 4, 256>}, {pipeline_mode = #tpu.pipeline_mode<synchronous>, transform_indices = @transform_1, window_bounds = array<i64: 16, 36>}, {pipeline_mode = #tpu.pipeline_mode<synchronous>, transform_indices = @transform_2, window_bounds = array<i64: 16, 1>}, {pipeline_mode = #tpu.pipeline_mode<synchronous>, transform_indices = @transform_3, window_bounds = array<i64: 16, 180>}, {pipeline_mode = #tpu.pipeline_mode<synchronous>, transform_indices = @transform_4, window_bounds = array<i64: 16, 1>}, {pipeline_mode = #tpu.pipeline_mode<synchronous>, transform_indices = @transform_5, window_bounds = array<i64: 16, 324>}, {pipeline_mode = #tpu.pipeline_mode<synchronous>, transform_indices = @transform_6, window_bounds = array<i64: 16, 1>}, {transform_indices = @transform_7, window_bounds = array<i64: 1, 52, 256>}]} {
    %0 = tpu.iota {dimensions = array<i32: 1>} : vector<1x256xi32>
    %c16_i32 = arith.constant 16 : i32
    %c0_i32 = arith.constant 0 : i32
    %1 = arith.cmpi eq, %c16_i32, %c0_i32 : i32
    %c1_i32 = arith.constant 1 : i32
    %2 = arith.select %1, %c1_i32, %c16_i32 : i32
    %3 = vector.broadcast %2 : i32 to vector<1x256xi32>
    %4 = arith.remsi %0, %3 : vector<1x256xi32>
    %c0_i32_0 = arith.constant 0 : i32
    %5 = vector.broadcast %c0_i32_0 : i32 to vector<1x256xi32>
    %6 = arith.cmpi ne, %4, %5 : vector<1x256xi32>
    %c0_i32_1 = arith.constant 0 : i32
    %7 = vector.broadcast %c0_i32_1 : i32 to vector<1x256xi32>
    %8 = arith.cmpi slt, %4, %7 : vector<1x256xi32>
    %c0_i32_2 = arith.constant 0 : i32
    %9 = arith.cmpi slt, %2, %c0_i32_2 : i32
    %10 = vector.broadcast %9 : i1 to vector<1x256xi1>
    %11 = vector.broadcast %10 : vector<1x256xi1> to vector<1x256xi1>
    %12 = arith.xori %8, %11 : vector<1x256xi1>
    %13 = arith.andi %12, %6 : vector<1x256xi1>
    %14 = vector.broadcast %2 : i32 to vector<1x256xi32>
    %15 = arith.addi %4, %14 : vector<1x256xi32>
    %16 = arith.select %13, %15, %4 : vector<1x256xi1>, vector<1x256xi32>
    %c0 = arith.constant 0 : index
    %c0_3 = arith.constant 0 : index
    %c0_4 = arith.constant 0 : index
    %17 = vector.load %arg1[%c0, %c0_3, %c0_4] : memref<1x4x256xf32, #tpu.memory_space<vmem>>, vector<1x4x256xf32>
    %18 = vector.shape_cast %17 : vector<1x4x256xf32> to vector<4x256xf32>
    %c0_5 = arith.constant 0 : index
    %c0_6 = arith.constant 0 : index
    %c0_7 = arith.constant 0 : index
    %19 = vector.load %arg8[%c0_5, %c0_6, %c0_7] : memref<1x52x256xf32, #tpu.memory_space<vmem>>, vector<1x4x256xf32>
    %20 = vector.shape_cast %19 : vector<1x4x256xf32> to vector<4x256xf32>
    %21 = vector.shape_cast %18 : vector<4x256xf32> to vector<1x4x256xf32>
    tpu.vector_store %arg8[%c0_5, %c0_6, %c0_7], %21 {strides = array<i32>} : memref<1x52x256xf32, #tpu.memory_space<vmem>>, vector<1x4x256xf32>,
    %22 = arith.truncf %18 : vector<4x256xf32> to vector<4x256xbf16>
    %c0_8 = arith.constant 0 : index
    %c17 = arith.constant 17 : index
    %23 = vector.load %arg9[%c0_8, %c17] : memref<36x290xbf16, #tpu.memory_space<vmem>>, vector<4x256xbf16>
    tpu.vector_store %arg9[%c0_8, %c17], %22 {strides = array<i32>} : memref<36x290xbf16, #tpu.memory_space<vmem>>, vector<4x256xbf16>,
    %c0_9 = arith.constant 0 : index
    %c33 = arith.constant 33 : index
    %24 = vector.load %arg9[%c0_9, %c33] : memref<36x290xbf16, #tpu.memory_space<vmem>>, vector<4x16xbf16>
    %c0_10 = arith.constant 0 : index
    %c1 = arith.constant 1 : index
    %25 = vector.load %arg9[%c0_10, %c1] : memref<36x290xbf16, #tpu.memory_space<vmem>>, vector<4x16xbf16>
    tpu.vector_store %arg9[%c0_10, %c1], %24 {strides = array<i32>} : memref<36x290xbf16, #tpu.memory_space<vmem>>, vector<4x16xbf16>,
    %c0_11 = arith.constant 0 : index
    %c241 = arith.constant 241 : index
    %26 = vector.load %arg9[%c0_11, %c241] : memref<36x290xbf16, #tpu.memory_space<vmem>>, vector<4x16xbf16>
    %c0_12 = arith.constant 0 : index
    %c273 = arith.constant 273 : index
    %27 = vector.load %arg9[%c0_12, %c273] : memref<36x290xbf16, #tpu.memory_space<vmem>>, vector<4x16xbf16>
    tpu.vector_store %arg9[%c0_12, %c273], %26 {strides = array<i32>} : memref<36x290xbf16, #tpu.memory_space<vmem>>, vector<4x16xbf16>,
    %c0_13 = arith.constant 0 : index
    %c0_14 = arith.constant 0 : index
    %28 = vector.load %arg9[%c0_13, %c0_14] : memref<36x290xbf16, #tpu.memory_space<vmem>>, vector<4x256xbf16>
    %c0_15 = arith.constant 0 : index
    %c1_16 = arith.constant 1 : index
    %29 = vector.load %arg9[%c0_15, %c1_16] : memref<36x290xbf16, #tpu.memory_space<vmem>>, vector<4x256xbf16>
    %c0_17 = arith.constant 0 : index
    %c2 = arith.constant 2 : index
    %30 = vector.load %arg9[%c0_17, %c2] : memref<36x290xbf16, #tpu.memory_space<vmem>>, vector<4x256xbf16>
    %c0_i32_18 = arith.constant 0 : i32
    %31 = vector.broadcast %c0_i32_18 : i32 to vector<1x256xi32>
    %32 = arith.cmpi eq, %16, %31 : vector<1x256xi32>
    %33 = vector.shape_cast %32 : vector<1x256xi1> to vector<1x256xi1>
    %34 = vector.broadcast %33 : vector<1x256xi1> to vector<4x256xi1>
    %35 = arith.select %34, %30, %28 : vector<4x256xi1>, vector<4x256xbf16>
    %c0_19 = arith.constant 0 : index
    %c0_20 = arith.constant 0 : index
    %36 = vector.load %arg10[%c0_19, %c0_20] : memref<324x256xbf16, #tpu.memory_space<vmem>>, vector<4x256xbf16>
    tpu.vector_store %arg10[%c0_19, %c0_20], %35 {strides = array<i32>} : memref<324x256xbf16, #tpu.memory_space<vmem>>, vector<4x256xbf16>,
    %c4 = arith.constant 4 : index
    %c0_21 = arith.constant 0 : index
    %37 = vector.load %arg10[%c4, %c0_21] : memref<324x256xbf16, #tpu.memory_space<vmem>>, vector<4x256xbf16>
    tpu.vector_store %arg10[%c4, %c0_21], %29 {strides = array<i32>} : memref<324x256xbf16, #tpu.memory_space<vmem>>, vector<4x256xbf16>,
    %c15_i32 = arith.constant 15 : i32
    %38 = vector.broadcast %c15_i32 : i32 to vector<1x256xi32>
    %39 = arith.cmpi eq, %16, %38 : vector<1x256xi32>
    %40 = vector.shape_cast %39 : vector<1x256xi1> to vector<1x256xi1>
    %41 = vector.broadcast %40 : vector<1x256xi1> to vector<4x256xi1>
    %42 = arith.select %41, %28, %30 : vector<4x256xi1>, vector<4x256xbf16>
    %c8 = arith.constant 8 : index
    %c0_22 = arith.constant 0 : index
    %43 = vector.load %arg10[%c8, %c0_22] : memref<324x256xbf16, #tpu.memory_space<vmem>>, vector<4x256xbf16>
    tpu.vector_store %arg10[%c8, %c0_22], %42 {strides = array<i32>} : memref<324x256xbf16, #tpu.memory_space<vmem>>, vector<4x256xbf16>,
    %c0_23 = arith.constant 0 : index
    %c16 = arith.constant 16 : index
    %44 = vector.load %arg9[%c0_23, %c16] : memref<36x290xbf16, #tpu.memory_space<vmem>>, vector<4x256xbf16>
    %c0_24 = arith.constant 0 : index
    %c17_25 = arith.constant 17 : index
    %45 = vector.load %arg9[%c0_24, %c17_25] : memref<36x290xbf16, #tpu.memory_space<vmem>>, vector<4x256xbf16>
    %c0_26 = arith.constant 0 : index
    %c18 = arith.constant 18 : index
    %46 = vector.load %arg9[%c0_26, %c18] : memref<36x290xbf16, #tpu.memory_space<vmem>>, vector<4x256xbf16>
    %c0_i32_27 = arith.constant 0 : i32
    %47 = vector.broadcast %c0_i32_27 : i32 to vector<1x256xi32>
    %48 = arith.cmpi eq, %16, %47 : vector<1x256xi32>
    %49 = vector.shape_cast %48 : vector<1x256xi1> to vector<1x256xi1>
    %50 = vector.broadcast %49 : vector<1x256xi1> to vector<4x256xi1>
    %51 = arith.select %50, %46, %44 : vector<4x256xi1>, vector<4x256xbf16>
    %c12 = arith.constant 12 : index
    %c0_28 = arith.constant 0 : index
    %52 = vector.load %arg10[%c12, %c0_28] : memref<324x256xbf16, #tpu.memory_space<vmem>>, vector<4x256xbf16>
    tpu.vector_store %arg10[%c12, %c0_28], %51 {strides = array<i32>} : memref<324x256xbf16, #tpu.memory_space<vmem>>, vector<4x256xbf16>,
    %c16_29 = arith.constant 16 : index
    %c0_30 = arith.constant 0 : index
    %53 = vector.load %arg10[%c16_29, %c0_30] : memref<324x256xbf16, #tpu.memory_space<vmem>>, vector<4x256xbf16>
    tpu.vector_store %arg10[%c16_29, %c0_30], %45 {strides = array<i32>} : memref<324x256xbf16, #tpu.memory_space<vmem>>, vector<4x256xbf16>,
    %c15_i32_31 = arith.constant 15 : i32
    %54 = vector.broadcast %c15_i32_31 : i32 to vector<1x256xi32>
    %55 = arith.cmpi eq, %16, %54 : vector<1x256xi32>
    %56 = vector.shape_cast %55 : vector<1x256xi1> to vector<1x256xi1>
    %57 = vector.broadcast %56 : vector<1x256xi1> to vector<4x256xi1>
    %58 = arith.select %57, %44, %46 : vector<4x256xi1>, vector<4x256xbf16>
    %c20 = arith.constant 20 : index
    %c0_32 = arith.constant 0 : index
    %59 = vector.load %arg10[%c20, %c0_32] : memref<324x256xbf16, #tpu.memory_space<vmem>>, vector<4x256xbf16>
    tpu.vector_store %arg10[%c20, %c0_32], %58 {strides = array<i32>} : memref<324x256xbf16, #tpu.memory_space<vmem>>, vector<4x256xbf16>,
    %c0_33 = arith.constant 0 : index
    %c32 = arith.constant 32 : index
    %60 = vector.load %arg9[%c0_33, %c32] : memref<36x290xbf16, #tpu.memory_space<vmem>>, vector<4x256xbf16>
    %c0_34 = arith.constant 0 : index
    %c33_35 = arith.constant 33 : index
    %61 = vector.load %arg9[%c0_34, %c33_35] : memref<36x290xbf16, #tpu.memory_space<vmem>>, vector<4x256xbf16>
    %c0_36 = arith.constant 0 : index
    %c34 = arith.constant 34 : index
    %62 = vector.load %arg9[%c0_36, %c34] : memref<36x290xbf16, #tpu.memory_space<vmem>>, vector<4x256xbf16>
    %c0_i32_37 = arith.constant 0 : i32
    %63 = vector.broadcast %c0_i32_37 : i32 to vector<1x256xi32>
    %64 = arith.cmpi eq, %16, %63 : vector<1x256xi32>
    %65 = vector.shape_cast %64 : vector<1x256xi1> to vector<1x256xi1>
    %66 = vector.broadcast %65 : vector<1x256xi1> to vector<4x256xi1>
    %67 = arith.select %66, %62, %60 : vector<4x256xi1>, vector<4x256xbf16>
    %c24 = arith.constant 24 : index
    %c0_38 = arith.constant 0 : index
    %68 = vector.load %arg10[%c24, %c0_38] : memref<324x256xbf16, #tpu.memory_space<vmem>>, vector<4x256xbf16>
    tpu.vector_store %arg10[%c24, %c0_38], %67 {strides = array<i32>} : memref<324x256xbf16, #tpu.memory_space<vmem>>, vector<4x256xbf16>,
    %c28 = arith.constant 28 : index
    %c0_39 = arith.constant 0 : index
    %69 = vector.load %arg10[%c28, %c0_39] : memref<324x256xbf16, #tpu.memory_space<vmem>>, vector<4x256xbf16>
    tpu.vector_store %arg10[%c28, %c0_39], %61 {strides = array<i32>} : memref<324x256xbf16, #tpu.memory_space<vmem>>, vector<4x256xbf16>,
    %c15_i32_40 = arith.constant 15 : i32
    %70 = vector.broadcast %c15_i32_40 : i32 to vector<1x256xi32>
    %71 = arith.cmpi eq, %16, %70 : vector<1x256xi32>
    %72 = vector.shape_cast %71 : vector<1x256xi1> to vector<1x256xi1>
    %73 = vector.broadcast %72 : vector<1x256xi1> to vector<4x256xi1>
    %74 = arith.select %73, %60, %62 : vector<4x256xi1>, vector<4x256xbf16>
    %c32_41 = arith.constant 32 : index
    %c0_42 = arith.constant 0 : index
    %75 = vector.load %arg10[%c32_41, %c0_42] : memref<324x256xbf16, #tpu.memory_space<vmem>>, vector<4x256xbf16>
    tpu.vector_store %arg10[%c32_41, %c0_42], %74 {strides = array<i32>} : memref<324x256xbf16, #tpu.memory_space<vmem>>, vector<4x256xbf16>,
    %c0_43 = arith.constant 0 : index
    %c0_44 = arith.constant 0 : index
    %76 = vector.load %arg2[%c0_43, %c0_44] : memref<16x36xbf16, #tpu.memory_space<vmem>>, vector<16x36xbf16>
    %c0_45 = arith.constant 0 : index
    %c0_46 = arith.constant 0 : index
    %77 = vector.load %arg10[%c0_45, %c0_46] : memref<324x256xbf16, #tpu.memory_space<vmem>>, vector<36x256xbf16>
    %cst = arith.constant dense<0.000000e+00> : vector<16x256xf32>
    %78 = tpu.matmul %76, %77, %cst {dimension_numbers = #tpu.dot_dimension_numbers<[1], [0], [0], [1], [0, 0, 1, 1], [], []>} : vector<16x36xbf16>, vector<36x256xbf16>, vector<16x256xf32> -> vector<16x256xf32>
    %c0_47 = arith.constant 0 : index
    %c0_48 = arith.constant 0 : index
    %79 = vector.load %arg3[%c0_47, %c0_48] : memref<16x1xf32, #tpu.memory_space<vmem>>, vector<16x1xf32>
    %80 = vector.broadcast %79 : vector<16x1xf32> to vector<16x256xf32>
    %81 = arith.addf %78, %80 : vector<16x256xf32>
    %cst_49 = arith.constant 0.000000e+00 : f32
    %82 = vector.broadcast %cst_49 : f32 to vector<16x256xf32>
    %83 = arith.maximumf %81, %82 : vector<16x256xf32>
    %c0_50 = arith.constant 0 : index
    %c4_51 = arith.constant 4 : index
    %c0_52 = arith.constant 0 : index
    %84 = vector.load %arg8[%c0_50, %c4_51, %c0_52] : memref<1x52x256xf32, #tpu.memory_space<vmem>>, vector<1x16x256xf32>
    %85 = vector.shape_cast %84 : vector<1x16x256xf32> to vector<16x256xf32>
    %86 = vector.shape_cast %83 : vector<16x256xf32> to vector<1x16x256xf32>
    tpu.vector_store %arg8[%c0_50, %c4_51, %c0_52], %86 {strides = array<i32>} : memref<1x52x256xf32, #tpu.memory_space<vmem>>, vector<1x16x256xf32>,
    %87 = arith.truncf %83 : vector<16x256xf32> to vector<16x256xbf16>
    %c4_53 = arith.constant 4 : index
    %c17_54 = arith.constant 17 : index
    %88 = vector.load %arg9[%c4_53, %c17_54] : memref<36x290xbf16, #tpu.memory_space<vmem>>, vector<16x256xbf16>
    tpu.vector_store %arg9[%c4_53, %c17_54], %87 {strides = array<i32>} : memref<36x290xbf16, #tpu.memory_space<vmem>>, vector<16x256xbf16>,
    %c4_55 = arith.constant 4 : index
    %c33_56 = arith.constant 33 : index
    %89 = vector.load %arg9[%c4_55, %c33_56] : memref<36x290xbf16, #tpu.memory_space<vmem>>, vector<16x16xbf16>
    %c4_57 = arith.constant 4 : index
    %c1_58 = arith.constant 1 : index
    %90 = vector.load %arg9[%c4_57, %c1_58] : memref<36x290xbf16, #tpu.memory_space<vmem>>, vector<16x16xbf16>
    tpu.vector_store %arg9[%c4_57, %c1_58], %89 {strides = array<i32>} : memref<36x290xbf16, #tpu.memory_space<vmem>>, vector<16x16xbf16>,
    %c4_59 = arith.constant 4 : index
    %c241_60 = arith.constant 241 : index
    %91 = vector.load %arg9[%c4_59, %c241_60] : memref<36x290xbf16, #tpu.memory_space<vmem>>, vector<16x16xbf16>
    %c4_61 = arith.constant 4 : index
    %c273_62 = arith.constant 273 : index
    %92 = vector.load %arg9[%c4_61, %c273_62] : memref<36x290xbf16, #tpu.memory_space<vmem>>, vector<16x16xbf16>
    tpu.vector_store %arg9[%c4_61, %c273_62], %91 {strides = array<i32>} : memref<36x290xbf16, #tpu.memory_space<vmem>>, vector<16x16xbf16>,
    %c4_63 = arith.constant 4 : index
    %c0_64 = arith.constant 0 : index
    %93 = vector.load %arg9[%c4_63, %c0_64] : memref<36x290xbf16, #tpu.memory_space<vmem>>, vector<16x256xbf16>
    %c4_65 = arith.constant 4 : index
    %c1_66 = arith.constant 1 : index
    %94 = vector.load %arg9[%c4_65, %c1_66] : memref<36x290xbf16, #tpu.memory_space<vmem>>, vector<16x256xbf16>
    %c4_67 = arith.constant 4 : index
    %c2_68 = arith.constant 2 : index
    %95 = vector.load %arg9[%c4_67, %c2_68] : memref<36x290xbf16, #tpu.memory_space<vmem>>, vector<16x256xbf16>
    %c0_i32_69 = arith.constant 0 : i32
    %96 = vector.broadcast %c0_i32_69 : i32 to vector<1x256xi32>
    %97 = arith.cmpi eq, %16, %96 : vector<1x256xi32>
    %98 = vector.shape_cast %97 : vector<1x256xi1> to vector<1x256xi1>
    %99 = vector.broadcast %98 : vector<1x256xi1> to vector<16x256xi1>
    %100 = arith.select %99, %95, %93 : vector<16x256xi1>, vector<16x256xbf16>
    %c36 = arith.constant 36 : index
    %c0_70 = arith.constant 0 : index
    %101 = vector.load %arg10[%c36, %c0_70] : memref<324x256xbf16, #tpu.memory_space<vmem>>, vector<16x256xbf16>
    tpu.vector_store %arg10[%c36, %c0_70], %100 {strides = array<i32>} : memref<324x256xbf16, #tpu.memory_space<vmem>>, vector<16x256xbf16>,
    %c52 = arith.constant 52 : index
    %c0_71 = arith.constant 0 : index
    %102 = vector.load %arg10[%c52, %c0_71] : memref<324x256xbf16, #tpu.memory_space<vmem>>, vector<16x256xbf16>
    tpu.vector_store %arg10[%c52, %c0_71], %94 {strides = array<i32>} : memref<324x256xbf16, #tpu.memory_space<vmem>>, vector<16x256xbf16>,
    %c15_i32_72 = arith.constant 15 : i32
    %103 = vector.broadcast %c15_i32_72 : i32 to vector<1x256xi32>
    %104 = arith.cmpi eq, %16, %103 : vector<1x256xi32>
    %105 = vector.shape_cast %104 : vector<1x256xi1> to vector<1x256xi1>
    %106 = vector.broadcast %105 : vector<1x256xi1> to vector<16x256xi1>
    %107 = arith.select %106, %93, %95 : vector<16x256xi1>, vector<16x256xbf16>
    %c68 = arith.constant 68 : index
    %c0_73 = arith.constant 0 : index
    %108 = vector.load %arg10[%c68, %c0_73] : memref<324x256xbf16, #tpu.memory_space<vmem>>, vector<16x256xbf16>
    tpu.vector_store %arg10[%c68, %c0_73], %107 {strides = array<i32>} : memref<324x256xbf16, #tpu.memory_space<vmem>>, vector<16x256xbf16>,
    %c4_74 = arith.constant 4 : index
    %c16_75 = arith.constant 16 : index
    %109 = vector.load %arg9[%c4_74, %c16_75] : memref<36x290xbf16, #tpu.memory_space<vmem>>, vector<16x256xbf16>
    %c4_76 = arith.constant 4 : index
    %c17_77 = arith.constant 17 : index
    %110 = vector.load %arg9[%c4_76, %c17_77] : memref<36x290xbf16, #tpu.memory_space<vmem>>, vector<16x256xbf16>
    %c4_78 = arith.constant 4 : index
    %c18_79 = arith.constant 18 : index
    %111 = vector.load %arg9[%c4_78, %c18_79] : memref<36x290xbf16, #tpu.memory_space<vmem>>, vector<16x256xbf16>
    %c0_i32_80 = arith.constant 0 : i32
    %112 = vector.broadcast %c0_i32_80 : i32 to vector<1x256xi32>
    %113 = arith.cmpi eq, %16, %112 : vector<1x256xi32>
    %114 = vector.shape_cast %113 : vector<1x256xi1> to vector<1x256xi1>
    %115 = vector.broadcast %114 : vector<1x256xi1> to vector<16x256xi1>
    %116 = arith.select %115, %111, %109 : vector<16x256xi1>, vector<16x256xbf16>
    %c84 = arith.constant 84 : index
    %c0_81 = arith.constant 0 : index
    %117 = vector.load %arg10[%c84, %c0_81] : memref<324x256xbf16, #tpu.memory_space<vmem>>, vector<16x256xbf16>
    tpu.vector_store %arg10[%c84, %c0_81], %116 {strides = array<i32>} : memref<324x256xbf16, #tpu.memory_space<vmem>>, vector<16x256xbf16>,
    %c100 = arith.constant 100 : index
    %c0_82 = arith.constant 0 : index
    %118 = vector.load %arg10[%c100, %c0_82] : memref<324x256xbf16, #tpu.memory_space<vmem>>, vector<16x256xbf16>
    tpu.vector_store %arg10[%c100, %c0_82], %110 {strides = array<i32>} : memref<324x256xbf16, #tpu.memory_space<vmem>>, vector<16x256xbf16>,
    %c15_i32_83 = arith.constant 15 : i32
    %119 = vector.broadcast %c15_i32_83 : i32 to vector<1x256xi32>
    %120 = arith.cmpi eq, %16, %119 : vector<1x256xi32>
    %121 = vector.shape_cast %120 : vector<1x256xi1> to vector<1x256xi1>
    %122 = vector.broadcast %121 : vector<1x256xi1> to vector<16x256xi1>
    %123 = arith.select %122, %109, %111 : vector<16x256xi1>, vector<16x256xbf16>
    %c116 = arith.constant 116 : index
    %c0_84 = arith.constant 0 : index
    %124 = vector.load %arg10[%c116, %c0_84] : memref<324x256xbf16, #tpu.memory_space<vmem>>, vector<16x256xbf16>
    tpu.vector_store %arg10[%c116, %c0_84], %123 {strides = array<i32>} : memref<324x256xbf16, #tpu.memory_space<vmem>>, vector<16x256xbf16>,
    %c4_85 = arith.constant 4 : index
    %c32_86 = arith.constant 32 : index
    %125 = vector.load %arg9[%c4_85, %c32_86] : memref<36x290xbf16, #tpu.memory_space<vmem>>, vector<16x256xbf16>
    %c4_87 = arith.constant 4 : index
    %c33_88 = arith.constant 33 : index
    %126 = vector.load %arg9[%c4_87, %c33_88] : memref<36x290xbf16, #tpu.memory_space<vmem>>, vector<16x256xbf16>
    %c4_89 = arith.constant 4 : index
    %c34_90 = arith.constant 34 : index
    %127 = vector.load %arg9[%c4_89, %c34_90] : memref<36x290xbf16, #tpu.memory_space<vmem>>, vector<16x256xbf16>
    %c0_i32_91 = arith.constant 0 : i32
    %128 = vector.broadcast %c0_i32_91 : i32 to vector<1x256xi32>
    %129 = arith.cmpi eq, %16, %128 : vector<1x256xi32>
    %130 = vector.shape_cast %129 : vector<1x256xi1> to vector<1x256xi1>
    %131 = vector.broadcast %130 : vector<1x256xi1> to vector<16x256xi1>
    %132 = arith.select %131, %127, %125 : vector<16x256xi1>, vector<16x256xbf16>
    %c132 = arith.constant 132 : index
    %c0_92 = arith.constant 0 : index
    %133 = vector.load %arg10[%c132, %c0_92] : memref<324x256xbf16, #tpu.memory_space<vmem>>, vector<16x256xbf16>
    tpu.vector_store %arg10[%c132, %c0_92], %132 {strides = array<i32>} : memref<324x256xbf16, #tpu.memory_space<vmem>>, vector<16x256xbf16>,
    %c148 = arith.constant 148 : index
    %c0_93 = arith.constant 0 : index
    %134 = vector.load %arg10[%c148, %c0_93] : memref<324x256xbf16, #tpu.memory_space<vmem>>, vector<16x256xbf16>
    tpu.vector_store %arg10[%c148, %c0_93], %126 {strides = array<i32>} : memref<324x256xbf16, #tpu.memory_space<vmem>>, vector<16x256xbf16>,
    %c15_i32_94 = arith.constant 15 : i32
    %135 = vector.broadcast %c15_i32_94 : i32 to vector<1x256xi32>
    %136 = arith.cmpi eq, %16, %135 : vector<1x256xi32>
    %137 = vector.shape_cast %136 : vector<1x256xi1> to vector<1x256xi1>
    %138 = vector.broadcast %137 : vector<1x256xi1> to vector<16x256xi1>
    %139 = arith.select %138, %125, %127 : vector<16x256xi1>, vector<16x256xbf16>
    %c164 = arith.constant 164 : index
    %c0_95 = arith.constant 0 : index
    %140 = vector.load %arg10[%c164, %c0_95] : memref<324x256xbf16, #tpu.memory_space<vmem>>, vector<16x256xbf16>
    tpu.vector_store %arg10[%c164, %c0_95], %139 {strides = array<i32>} : memref<324x256xbf16, #tpu.memory_space<vmem>>, vector<16x256xbf16>,
    %c0_96 = arith.constant 0 : index
    %c0_97 = arith.constant 0 : index
    %141 = vector.load %arg4[%c0_96, %c0_97] : memref<16x180xbf16, #tpu.memory_space<vmem>>, vector<16x180xbf16>
    %c0_98 = arith.constant 0 : index
    %c0_99 = arith.constant 0 : index
    %142 = vector.load %arg10[%c0_98, %c0_99] : memref<324x256xbf16, #tpu.memory_space<vmem>>, vector<180x256xbf16>
    %cst_100 = arith.constant dense<0.000000e+00> : vector<16x256xf32>
    %143 = tpu.matmul %141, %142, %cst_100 {dimension_numbers = #tpu.dot_dimension_numbers<[1], [0], [0], [1], [0, 0, 1, 1], [], []>} : vector<16x180xbf16>, vector<180x256xbf16>, vector<16x256xf32> -> vector<16x256xf32>
    %c0_101 = arith.constant 0 : index
    %c0_102 = arith.constant 0 : index
    %144 = vector.load %arg5[%c0_101, %c0_102] : memref<16x1xf32, #tpu.memory_space<vmem>>, vector<16x1xf32>
    %145 = vector.broadcast %144 : vector<16x1xf32> to vector<16x256xf32>
    %146 = arith.addf %143, %145 : vector<16x256xf32>
    %cst_103 = arith.constant 0.000000e+00 : f32
    %147 = vector.broadcast %cst_103 : f32 to vector<16x256xf32>
    %148 = arith.maximumf %146, %147 : vector<16x256xf32>
    %c0_104 = arith.constant 0 : index
    %c20_105 = arith.constant 20 : index
    %c0_106 = arith.constant 0 : index
    %149 = vector.load %arg8[%c0_104, %c20_105, %c0_106] : memref<1x52x256xf32, #tpu.memory_space<vmem>>, vector<1x16x256xf32>
    %150 = vector.shape_cast %149 : vector<1x16x256xf32> to vector<16x256xf32>
    %151 = vector.shape_cast %148 : vector<16x256xf32> to vector<1x16x256xf32>
    tpu.vector_store %arg8[%c0_104, %c20_105, %c0_106], %151 {strides = array<i32>} : memref<1x52x256xf32, #tpu.memory_space<vmem>>, vector<1x16x256xf32>,
    %152 = arith.truncf %148 : vector<16x256xf32> to vector<16x256xbf16>
    %c20_107 = arith.constant 20 : index
    %c17_108 = arith.constant 17 : index
    %153 = vector.load %arg9[%c20_107, %c17_108] : memref<36x290xbf16, #tpu.memory_space<vmem>>, vector<16x256xbf16>
    tpu.vector_store %arg9[%c20_107, %c17_108], %152 {strides = array<i32>} : memref<36x290xbf16, #tpu.memory_space<vmem>>, vector<16x256xbf16>,
    %c20_109 = arith.constant 20 : index
    %c33_110 = arith.constant 33 : index
    %154 = vector.load %arg9[%c20_109, %c33_110] : memref<36x290xbf16, #tpu.memory_space<vmem>>, vector<16x16xbf16>
    %c20_111 = arith.constant 20 : index
    %c1_112 = arith.constant 1 : index
    %155 = vector.load %arg9[%c20_111, %c1_112] : memref<36x290xbf16, #tpu.memory_space<vmem>>, vector<16x16xbf16>
    tpu.vector_store %arg9[%c20_111, %c1_112], %154 {strides = array<i32>} : memref<36x290xbf16, #tpu.memory_space<vmem>>, vector<16x16xbf16>,
    %c20_113 = arith.constant 20 : index
    %c241_114 = arith.constant 241 : index
    %156 = vector.load %arg9[%c20_113, %c241_114] : memref<36x290xbf16, #tpu.memory_space<vmem>>, vector<16x16xbf16>
    %c20_115 = arith.constant 20 : index
    %c273_116 = arith.constant 273 : index
    %157 = vector.load %arg9[%c20_115, %c273_116] : memref<36x290xbf16, #tpu.memory_space<vmem>>, vector<16x16xbf16>
    tpu.vector_store %arg9[%c20_115, %c273_116], %156 {strides = array<i32>} : memref<36x290xbf16, #tpu.memory_space<vmem>>, vector<16x16xbf16>,
    %c20_117 = arith.constant 20 : index
    %c0_118 = arith.constant 0 : index
    %158 = vector.load %arg9[%c20_117, %c0_118] : memref<36x290xbf16, #tpu.memory_space<vmem>>, vector<16x256xbf16>
    %c20_119 = arith.constant 20 : index
    %c1_120 = arith.constant 1 : index
    %159 = vector.load %arg9[%c20_119, %c1_120] : memref<36x290xbf16, #tpu.memory_space<vmem>>, vector<16x256xbf16>
    %c20_121 = arith.constant 20 : index
    %c2_122 = arith.constant 2 : index
    %160 = vector.load %arg9[%c20_121, %c2_122] : memref<36x290xbf16, #tpu.memory_space<vmem>>, vector<16x256xbf16>
    %c0_i32_123 = arith.constant 0 : i32
    %161 = vector.broadcast %c0_i32_123 : i32 to vector<1x256xi32>
    %162 = arith.cmpi eq, %16, %161 : vector<1x256xi32>
    %163 = vector.shape_cast %162 : vector<1x256xi1> to vector<1x256xi1>
    %164 = vector.broadcast %163 : vector<1x256xi1> to vector<16x256xi1>
    %165 = arith.select %164, %160, %158 : vector<16x256xi1>, vector<16x256xbf16>
    %c180 = arith.constant 180 : index
    %c0_124 = arith.constant 0 : index
    %166 = vector.load %arg10[%c180, %c0_124] : memref<324x256xbf16, #tpu.memory_space<vmem>>, vector<16x256xbf16>
    tpu.vector_store %arg10[%c180, %c0_124], %165 {strides = array<i32>} : memref<324x256xbf16, #tpu.memory_space<vmem>>, vector<16x256xbf16>,
    %c196 = arith.constant 196 : index
    %c0_125 = arith.constant 0 : index
    %167 = vector.load %arg10[%c196, %c0_125] : memref<324x256xbf16, #tpu.memory_space<vmem>>, vector<16x256xbf16>
    tpu.vector_store %arg10[%c196, %c0_125], %159 {strides = array<i32>} : memref<324x256xbf16, #tpu.memory_space<vmem>>, vector<16x256xbf16>,
    %c15_i32_126 = arith.constant 15 : i32
    %168 = vector.broadcast %c15_i32_126 : i32 to vector<1x256xi32>
    %169 = arith.cmpi eq, %16, %168 : vector<1x256xi32>
    %170 = vector.shape_cast %169 : vector<1x256xi1> to vector<1x256xi1>
    %171 = vector.broadcast %170 : vector<1x256xi1> to vector<16x256xi1>
    %172 = arith.select %171, %158, %160 : vector<16x256xi1>, vector<16x256xbf16>
    %c212 = arith.constant 212 : index
    %c0_127 = arith.constant 0 : index
    %173 = vector.load %arg10[%c212, %c0_127] : memref<324x256xbf16, #tpu.memory_space<vmem>>, vector<16x256xbf16>
    tpu.vector_store %arg10[%c212, %c0_127], %172 {strides = array<i32>} : memref<324x256xbf16, #tpu.memory_space<vmem>>, vector<16x256xbf16>,
    %c20_128 = arith.constant 20 : index
    %c16_129 = arith.constant 16 : index
    %174 = vector.load %arg9[%c20_128, %c16_129] : memref<36x290xbf16, #tpu.memory_space<vmem>>, vector<16x256xbf16>
    %c20_130 = arith.constant 20 : index
    %c17_131 = arith.constant 17 : index
    %175 = vector.load %arg9[%c20_130, %c17_131] : memref<36x290xbf16, #tpu.memory_space<vmem>>, vector<16x256xbf16>
    %c20_132 = arith.constant 20 : index
    %c18_133 = arith.constant 18 : index
    %176 = vector.load %arg9[%c20_132, %c18_133] : memref<36x290xbf16, #tpu.memory_space<vmem>>, vector<16x256xbf16>
    %c0_i32_134 = arith.constant 0 : i32
    %177 = vector.broadcast %c0_i32_134 : i32 to vector<1x256xi32>
    %178 = arith.cmpi eq, %16, %177 : vector<1x256xi32>
    %179 = vector.shape_cast %178 : vector<1x256xi1> to vector<1x256xi1>
    %180 = vector.broadcast %179 : vector<1x256xi1> to vector<16x256xi1>
    %181 = arith.select %180, %176, %174 : vector<16x256xi1>, vector<16x256xbf16>
    %c228 = arith.constant 228 : index
    %c0_135 = arith.constant 0 : index
    %182 = vector.load %arg10[%c228, %c0_135] : memref<324x256xbf16, #tpu.memory_space<vmem>>, vector<16x256xbf16>
    tpu.vector_store %arg10[%c228, %c0_135], %181 {strides = array<i32>} : memref<324x256xbf16, #tpu.memory_space<vmem>>, vector<16x256xbf16>,
    %c244 = arith.constant 244 : index
    %c0_136 = arith.constant 0 : index
    %183 = vector.load %arg10[%c244, %c0_136] : memref<324x256xbf16, #tpu.memory_space<vmem>>, vector<16x256xbf16>
    tpu.vector_store %arg10[%c244, %c0_136], %175 {strides = array<i32>} : memref<324x256xbf16, #tpu.memory_space<vmem>>, vector<16x256xbf16>,
    %c15_i32_137 = arith.constant 15 : i32
    %184 = vector.broadcast %c15_i32_137 : i32 to vector<1x256xi32>
    %185 = arith.cmpi eq, %16, %184 : vector<1x256xi32>
    %186 = vector.shape_cast %185 : vector<1x256xi1> to vector<1x256xi1>
    %187 = vector.broadcast %186 : vector<1x256xi1> to vector<16x256xi1>
    %188 = arith.select %187, %174, %176 : vector<16x256xi1>, vector<16x256xbf16>
    %c260 = arith.constant 260 : index
    %c0_138 = arith.constant 0 : index
    %189 = vector.load %arg10[%c260, %c0_138] : memref<324x256xbf16, #tpu.memory_space<vmem>>, vector<16x256xbf16>
    tpu.vector_store %arg10[%c260, %c0_138], %188 {strides = array<i32>} : memref<324x256xbf16, #tpu.memory_space<vmem>>, vector<16x256xbf16>,
    %c20_139 = arith.constant 20 : index
    %c32_140 = arith.constant 32 : index
    %190 = vector.load %arg9[%c20_139, %c32_140] : memref<36x290xbf16, #tpu.memory_space<vmem>>, vector<16x256xbf16>
    %c20_141 = arith.constant 20 : index
    %c33_142 = arith.constant 33 : index
    %191 = vector.load %arg9[%c20_141, %c33_142] : memref<36x290xbf16, #tpu.memory_space<vmem>>, vector<16x256xbf16>
    %c20_143 = arith.constant 20 : index
    %c34_144 = arith.constant 34 : index
    %192 = vector.load %arg9[%c20_143, %c34_144] : memref<36x290xbf16, #tpu.memory_space<vmem>>, vector<16x256xbf16>
    %c0_i32_145 = arith.constant 0 : i32
    %193 = vector.broadcast %c0_i32_145 : i32 to vector<1x256xi32>
    %194 = arith.cmpi eq, %16, %193 : vector<1x256xi32>
    %195 = vector.shape_cast %194 : vector<1x256xi1> to vector<1x256xi1>
    %196 = vector.broadcast %195 : vector<1x256xi1> to vector<16x256xi1>
    %197 = arith.select %196, %192, %190 : vector<16x256xi1>, vector<16x256xbf16>
    %c276 = arith.constant 276 : index
    %c0_146 = arith.constant 0 : index
    %198 = vector.load %arg10[%c276, %c0_146] : memref<324x256xbf16, #tpu.memory_space<vmem>>, vector<16x256xbf16>
    tpu.vector_store %arg10[%c276, %c0_146], %197 {strides = array<i32>} : memref<324x256xbf16, #tpu.memory_space<vmem>>, vector<16x256xbf16>,
    %c292 = arith.constant 292 : index
    %c0_147 = arith.constant 0 : index
    %199 = vector.load %arg10[%c292, %c0_147] : memref<324x256xbf16, #tpu.memory_space<vmem>>, vector<16x256xbf16>
    tpu.vector_store %arg10[%c292, %c0_147], %191 {strides = array<i32>} : memref<324x256xbf16, #tpu.memory_space<vmem>>, vector<16x256xbf16>,
    %c15_i32_148 = arith.constant 15 : i32
    %200 = vector.broadcast %c15_i32_148 : i32 to vector<1x256xi32>
    %201 = arith.cmpi eq, %16, %200 : vector<1x256xi32>
    %202 = vector.shape_cast %201 : vector<1x256xi1> to vector<1x256xi1>
    %203 = vector.broadcast %202 : vector<1x256xi1> to vector<16x256xi1>
    %204 = arith.select %203, %190, %192 : vector<16x256xi1>, vector<16x256xbf16>
    %c308 = arith.constant 308 : index
    %c0_149 = arith.constant 0 : index
    %205 = vector.load %arg10[%c308, %c0_149] : memref<324x256xbf16, #tpu.memory_space<vmem>>, vector<16x256xbf16>
    tpu.vector_store %arg10[%c308, %c0_149], %204 {strides = array<i32>} : memref<324x256xbf16, #tpu.memory_space<vmem>>, vector<16x256xbf16>,
    %c0_150 = arith.constant 0 : index
    %c0_151 = arith.constant 0 : index
    %206 = vector.load %arg6[%c0_150, %c0_151] : memref<16x324xbf16, #tpu.memory_space<vmem>>, vector<16x324xbf16>
    %c0_152 = arith.constant 0 : index
    %c0_153 = arith.constant 0 : index
    %207 = vector.load %arg10[%c0_152, %c0_153] : memref<324x256xbf16, #tpu.memory_space<vmem>>, vector<324x256xbf16>
    %cst_154 = arith.constant dense<0.000000e+00> : vector<16x256xf32>
    %208 = tpu.matmul %206, %207, %cst_154 {dimension_numbers = #tpu.dot_dimension_numbers<[1], [0], [0], [1], [0, 0, 1, 1], [], []>} : vector<16x324xbf16>, vector<324x256xbf16>, vector<16x256xf32> -> vector<16x256xf32>
    %c0_155 = arith.constant 0 : index
    %c0_156 = arith.constant 0 : index
    %209 = vector.load %arg7[%c0_155, %c0_156] : memref<16x1xf32, #tpu.memory_space<vmem>>, vector<16x1xf32>
    %210 = vector.broadcast %209 : vector<16x1xf32> to vector<16x256xf32>
    %211 = arith.addf %208, %210 : vector<16x256xf32>
    %cst_157 = arith.constant 0.000000e+00 : f32
    %212 = vector.broadcast %cst_157 : f32 to vector<16x256xf32>
    %213 = arith.maximumf %211, %212 : vector<16x256xf32>
    %c0_158 = arith.constant 0 : index
    %c36_159 = arith.constant 36 : index
    %c0_160 = arith.constant 0 : index
    %214 = vector.load %arg8[%c0_158, %c36_159, %c0_160] : memref<1x52x256xf32, #tpu.memory_space<vmem>>, vector<1x16x256xf32>
    %215 = vector.shape_cast %214 : vector<1x16x256xf32> to vector<16x256xf32>
    %216 = vector.shape_cast %213 : vector<16x256xf32> to vector<1x16x256xf32>
    tpu.vector_store %arg8[%c0_158, %c36_159, %c0_160], %216 {strides = array<i32>} : memref<1x52x256xf32, #tpu.memory_space<vmem>>, vector<1x16x256xf32>,
    return
  }
  func.func @transform_0(%arg0: i32) -> (i32, i32, i32) {
    %c0_i32 = arith.constant 0 : i32
    %c0_i32_0 = arith.constant 0 : i32
    %c0_i32_1 = arith.constant 0 : i32
    return %arg0, %c0_i32, %c0_i32_0 : i32, i32, i32
  }
  func.func @transform_1(%arg0: i32) -> (i32, i32) {
    %c0_i32 = arith.constant 0 : i32
    %c0_i32_0 = arith.constant 0 : i32
    %c0_i32_1 = arith.constant 0 : i32
    return %c0_i32, %c0_i32_0 : i32, i32
  }
  func.func @transform_2(%arg0: i32) -> (i32, i32) {
    %c0_i32 = arith.constant 0 : i32
    %c0_i32_0 = arith.constant 0 : i32
    %c0_i32_1 = arith.constant 0 : i32
    return %c0_i32, %c0_i32_0 : i32, i32
  }
  func.func @transform_3(%arg0: i32) -> (i32, i32) {
    %c0_i32 = arith.constant 0 : i32
    %c0_i32_0 = arith.constant 0 : i32
    %c0_i32_1 = arith.constant 0 : i32
    return %c0_i32, %c0_i32_0 : i32, i32
  }
  func.func @transform_4(%arg0: i32) -> (i32, i32) {
    %c0_i32 = arith.constant 0 : i32
    %c0_i32_0 = arith.constant 0 : i32
    %c0_i32_1 = arith.constant 0 : i32
    return %c0_i32, %c0_i32_0 : i32, i32
  }
  func.func @transform_5(%arg0: i32) -> (i32, i32) {
    %c0_i32 = arith.constant 0 : i32
    %c0_i32_0 = arith.constant 0 : i32
    %c0_i32_1 = arith.constant 0 : i32
    return %c0_i32, %c0_i32_0 : i32, i32
  }
  func.func @transform_6(%arg0: i32) -> (i32, i32) {
    %c0_i32 = arith.constant 0 : i32
    %c0_i32_0 = arith.constant 0 : i32
    %c0_i32_1 = arith.constant 0 : i32
    return %c0_i32, %c0_i32_0 : i32, i32
  }
  func.func @transform_7(%arg0: i32) -> (i32, i32, i32) {
    %c0_i32 = arith.constant 0 : i32
    %c0_i32_0 = arith.constant 0 : i32
    %c0_i32_1 = arith.constant 0 : i32
    return %arg0, %c0_i32, %c0_i32_0 : i32, i32, i32
  }
}

</mosaic_0001>

<llo_original>
// kernel: tpu_custom_call.1
$region0: #{tpu_custom_call.1}
  #allocation0 [shape = 'u32[]', space=smem, size = 0x4, offset = 0x4, fixed_abs, tag = 'smem constant byte address 0x4 - core index']
  #allocation1 [shape = 'u32[144,128]{1,0:T(1,128)}', space=vmem, size = 0x12000, scoped, tag = 'internal scratch']
  #allocation2 [shape = 'bf16[36,290]{1,0:T(8,128)(2,1)}', space=vmem, size = 0x7800, scoped, tag = 'scratch operand']
  #allocation3 [shape = 'bf16[324,256]{1,0:T(8,128)(2,1)}', space=vmem, size = 0x29000, scoped, tag = 'scratch operand']
  %s0 = inlined_call_operand.vmem [shape: f32[2,4,256], index: 0, kind: input, shape index: {}]
  %s1 = inlined_call_operand.hbm [shape: bf16[16,36], index: 1, kind: input, shape index: {}]
  %s2 = inlined_call_operand.vmem [shape: f32[16,1], index: 2, kind: input, shape index: {}]
  %s3 = inlined_call_operand.vmem [shape: bf16[16,180], index: 3, kind: input, shape index: {}]
  %s4 = inlined_call_operand.vmem [shape: f32[16,1], index: 4, kind: input, shape index: {}]
  %s5 = inlined_call_operand.vmem [shape: bf16[16,324], index: 5, kind: input, shape index: {}]
  %s6 = inlined_call_operand.vmem [shape: f32[16,1], index: 6, kind: input, shape index: {}]
  %s7 = inlined_call_operand.vmem [shape: f32[2,52,256], index: 7, kind: output, shape index: {}]
  %s8 = sld [smem:[#allocation0]]
  $region65: #{tpu_custom_call.1} parent=0
    _
  %s10 = ssub.s32 1, %s8
  %s11 = scalar_select 0, %s10, %s8
  $region1: #{tpu_custom_call.1} parent=0
    #allocation4 [shape = 'u8[4096]{0}', space=vmem, size = 0x1000, scoped, tag = 'input window, operand 1, single buffered']
    #allocation5 [shape = 's32[2]{0}', space=sflag, size = 0x8, scoped, tag = 'scoped memory for tpu_custom_call.1']
    %12 = vsyncpa [#allocation5], 0
    loop: start=0, step=1, limit=4
    $region2: #{tpu_custom_call.1} parent=1 // loop_pre_header
      _
    $region3: #{tpu_custom_call.1} parent=1 // loop_header
      %s14 = sphi 0, %s18
      %p15 = scmp.ge.s32.totalorder %s14, 4
      %s24 = sphi 0, %s26
      %s27 = sphi 0, %s24
      %s28 = sphi 0, %s27
      %s44 = sphi 0, %s28
      %s48 = sphi 0, %s48
      %s50 = sphi 0, %s48
      %s51 = sphi 0, %s50
      %s65 = sphi 0, %s51
      %s69 = sphi 0, %s69
      %s71 = sphi 0, %s69
      %s72 = sphi 0, %s71
      %s86 = sphi 0, %s72
      %s90 = sphi 0, %s90
      %s92 = sphi 0, %s90
      %s93 = sphi 0, %s92
      %s107 = sphi 0, %s93
      %s111 = sphi 0, %s111
      %s113 = sphi 0, %s111
      %s114 = sphi 0, %s113
      %s128 = sphi 0, %s114
      %s132 = sphi 0, %s132
      %s134 = sphi 0, %s132
      %s135 = sphi 0, %s134
      %s149 = sphi 0, %s135
      %s153 = sphi 0, %s153
      %s155 = sphi 0, %s153
      %s156 = sphi 0, %s155
      %s170 = sphi 0, %s156
      %s176 = sphi 0, %s178
      %s179 = sphi 0, %s176
      %s180 = sphi 0, %s179
      %s196 = sphi 0, %s180
    $region4: #{tpu_custom_call.1} parent=1 // loop_header_branch
      %17 = sbr.rel (%p15) target = $region8
    $region5: #{tpu_custom_call.1} parent=1 // loop_body
      %s19 = ssub.s32 %s14, 1
      %s20 = ssub.s32 %s14, 2
      %s21 = sadd.s32 %s14, 1
      %s22 = ssub.s32 %s14, %s21
      %p23 = scmp.eq.s32.totalorder %s22, 0
      %s25 = sadd.s32 %s24, 1
      %s26 = scalar_select %p23, %s24, %s25
      %p29 = pneg %p23
      %p30 = scmp.eq.s32.totalorder %s14, 1
      %p31 = por %p29, %p30
      %p32 = scmp.ne.s32.totalorder %s24, %s27
      %p33 = scmp.eq.s32.totalorder %s14, 0
      %p34 = por %p32, %p33
      %p35 = scmp.ne.s32.totalorder %s24, %s27
      %p36 = scmp.eq.s32.totalorder %s19, 1
      %p37 = por %p35, %p36
      %p38 = scmp.ne.s32.totalorder %s27, %s28
      %p39 = scmp.eq.s32.totalorder %s19, 0
      %p40 = por %p38, %p39
      %p41 = scmp.ne.s32.totalorder %s27, %s28
      %p42 = scmp.eq.s32.totalorder %s20, 1
      %p43 = por %p41, %p42
      %p45 = scmp.ne.s32.totalorder %s28, %s44
      %p46 = scmp.eq.s32.totalorder %s20, 0
      %p47 = por %p45, %p46
      %s49 = sadd.s32 %s48, 1
      %p52 = scmp.eq.s32.totalorder %s14, 1
      %p53 = scmp.ne.s32.totalorder %s48, %s50
      %p54 = scmp.eq.s32.totalorder %s14, 0
      %p55 = por %p53, %p54
      %p56 = scmp.ne.s32.totalorder %s48, %s50
      %p57 = scmp.eq.s32.totalorder %s19, 1
      %p58 = por %p56, %p57
      %p59 = scmp.ne.s32.totalorder %s50, %s51
      %p60 = scmp.eq.s32.totalorder %s19, 0
      %p61 = por %p59, %p60
      %p62 = scmp.ne.s32.totalorder %s50, %s51
      %p63 = scmp.eq.s32.totalorder %s20, 1
      %p64 = por %p62, %p63
      %p66 = scmp.ne.s32.totalorder %s51, %s65
      %p67 = scmp.eq.s32.totalorder %s20, 0
      %p68 = por %p66, %p67
      %s70 = sadd.s32 %s69, 1
      %p73 = scmp.eq.s32.totalorder %s14, 1
      %p74 = scmp.ne.s32.totalorder %s69, %s71
      %p75 = scmp.eq.s32.totalorder %s14, 0
      %p76 = por %p74, %p75
      %p77 = scmp.ne.s32.totalorder %s69, %s71
      %p78 = scmp.eq.s32.totalorder %s19, 1
      %p79 = por %p77, %p78
      %p80 = scmp.ne.s32.totalorder %s71, %s72
      %p81 = scmp.eq.s32.totalorder %s19, 0
      %p82 = por %p80, %p81
      %p83 = scmp.ne.s32.totalorder %s71, %s72
      %p84 = scmp.eq.s32.totalorder %s20, 1
      %p85 = por %p83, %p84
      %p87 = scmp.ne.s32.totalorder %s72, %s86
      %p88 = scmp.eq.s32.totalorder %s20, 0
      %p89 = por %p87, %p88
      %s91 = sadd.s32 %s90, 1
      %p94 = scmp.eq.s32.totalorder %s14, 1
      %p95 = scmp.ne.s32.totalorder %s90, %s92
      %p96 = scmp.eq.s32.totalorder %s14, 0
      %p97 = por %p95, %p96
      %p98 = scmp.ne.s32.totalorder %s90, %s92
      %p99 = scmp.eq.s32.totalorder %s19, 1
      %p100 = por %p98, %p99
      %p101 = scmp.ne.s32.totalorder %s92, %s93
      %p102 = scmp.eq.s32.totalorder %s19, 0
      %p103 = por %p101, %p102
      %p104 = scmp.ne.s32.totalorder %s92, %s93
      %p105 = scmp.eq.s32.totalorder %s20, 1
      %p106 = por %p104, %p105
      %p108 = scmp.ne.s32.totalorder %s93, %s107
      %p109 = scmp.eq.s32.totalorder %s20, 0
      %p110 = por %p108, %p109
      %s112 = sadd.s32 %s111, 1
      %p115 = scmp.eq.s32.totalorder %s14, 1
      %p116 = scmp.ne.s32.totalorder %s111, %s113
      %p117 = scmp.eq.s32.totalorder %s14, 0
      %p118 = por %p116, %p117
      %p119 = scmp.ne.s32.totalorder %s111, %s113
      %p120 = scmp.eq.s32.totalorder %s19, 1
      %p121 = por %p119, %p120
      %p122 = scmp.ne.s32.totalorder %s113, %s114
      %p123 = scmp.eq.s32.totalorder %s19, 0
      %p124 = por %p122, %p123
      %p125 = scmp.ne.s32.totalorder %s113, %s114
      %p126 = scmp.eq.s32.totalorder %s20, 1
      %p127 = por %p125, %p126
      %p129 = scmp.ne.s32.totalorder %s114, %s128
      %p130 = scmp.eq.s32.totalorder %s20, 0
      %p131 = por %p129, %p130
      %s133 = sadd.s32 %s132, 1
      %p136 = scmp.eq.s32.totalorder %s14, 1
      %p137 = scmp.ne.s32.totalorder %s132, %s134
      %p138 = scmp.eq.s32.totalorder %s14, 0
      %p139 = por %p137, %p138
      %p140 = scmp.ne.s32.totalorder %s132, %s134
      %p141 = scmp.eq.s32.totalorder %s19, 1
      %p142 = por %p140, %p141
      %p143 = scmp.ne.s32.totalorder %s134, %s135
      %p144 = scmp.eq.s32.totalorder %s19, 0
      %p145 = por %p143, %p144
      %p146 = scmp.ne.s32.totalorder %s134, %s135
      %p147 = scmp.eq.s32.totalorder %s20, 1
      %p148 = por %p146, %p147
      %p150 = scmp.ne.s32.totalorder %s135, %s149
      %p151 = scmp.eq.s32.totalorder %s20, 0
      %p152 = por %p150, %p151
      %s154 = sadd.s32 %s153, 1
      %p157 = scmp.eq.s32.totalorder %s14, 1
      %p158 = scmp.ne.s32.totalorder %s153, %s155
      %p159 = scmp.eq.s32.totalorder %s14, 0
      %p160 = por %p158, %p159
      %p161 = scmp.ne.s32.totalorder %s153, %s155
      %p162 = scmp.eq.s32.totalorder %s19, 1
      %p163 = por %p161, %p162
      %p164 = scmp.ne.s32.totalorder %s155, %s156
      %p165 = scmp.eq.s32.totalorder %s19, 0
      %p166 = por %p164, %p165
      %p167 = scmp.ne.s32.totalorder %s155, %s156
      %p168 = scmp.eq.s32.totalorder %s20, 1
      %p169 = por %p167, %p168
      %p171 = scmp.ne.s32.totalorder %s156, %s170
      %p172 = scmp.eq.s32.totalorder %s20, 0
      %p173 = por %p171, %p172
      %s174 = ssub.s32 %s14, %s21
      %p175 = scmp.eq.s32.totalorder %s174, 0
      %s177 = sadd.s32 %s176, 1
      %s178 = scalar_select %p175, %s176, %s177
      %p181 = pneg %p175
      %p182 = scmp.eq.s32.totalorder %s14, 1
      %p183 = por %p181, %p182
      %p184 = scmp.ne.s32.totalorder %s176, %s179
      %p185 = scmp.eq.s32.totalorder %s14, 0
      %p186 = por %p184, %p185
      %p187 = scmp.ne.s32.totalorder %s176, %s179
      %p188 = scmp.eq.s32.totalorder %s19, 1
      %p189 = por %p187, %p188
      %p190 = scmp.ne.s32.totalorder %s179, %s180
      %p191 = scmp.eq.s32.totalorder %s19, 0
      %p192 = por %p190, %p191
      %p193 = scmp.ne.s32.totalorder %s179, %s180
      %p194 = scmp.eq.s32.totalorder %s20, 1
      %p195 = por %p193, %p194
      %p197 = scmp.ne.s32.totalorder %s180, %s196
      %p198 = scmp.eq.s32.totalorder %s20, 0
      %p199 = por %p197, %p198
      %p200 = scmp.le.s32.totalorder 1, %s14
      %p201 = scmp.lt.s32.totalorder %s14, 3
      %p202 = pnand %p200, %p201
      %p203 = pneg %p202
      // Predicated region
      $region9: #{tpu_custom_call.1} parent=5 // pred_check
        _
      $region10: #{tpu_custom_call.1} parent=5 // pred_check_branch
        %205 = sbr.rel (%p202) target = $region12
      $region11: #{tpu_custom_call.1} parent=5 // pred_region
        %s206 = ssub.s32 %s14, 1
        // Predicated region
        $region13: #{tpu_custom_call.1} parent=11 // pred_check
          %p207 = pneg %p61
        $region14: #{tpu_custom_call.1} parent=11 // pred_check_branch
          %209 = sbr.rel (%p207) target = $region16
        $region15: #{tpu_custom_call.1} parent=11 // pred_region
          %s211 = ssub.s32 128, 128
          %212 = vsyncadd [#allocation5], %s211
          %s213 = sshll.u32 [#allocation4], 4
          %s214 = int_to_ptr.vmem [resolvable:$true] %s213
          %219 = dma.hbm_to_vmem [thread:$0]  %s1, 128, %s214, [#allocation5], 64, 64, 4
        $region16: #{tpu_custom_call.1} parent=11 // pred_fallthru
          _
        // Predicated region
        $region17: #{tpu_custom_call.1} parent=11 // pred_check
          %p220 = pneg %p82
        $region18: #{tpu_custom_call.1} parent=11 // pred_check_branch
          %222 = sbr.rel (%p220) target = $region20
        $region19: #{tpu_custom_call.1} parent=11 // pred_region
          _
        $region20: #{tpu_custom_call.1} parent=11 // pred_fallthru
          _
        // Predicated region
        $region21: #{tpu_custom_call.1} parent=11 // pred_check
          %p223 = pneg %p103
        $region22: #{tpu_custom_call.1} parent=11 // pred_check_branch
          %225 = sbr.rel (%p223) target = $region24
        $region23: #{tpu_custom_call.1} parent=11 // pred_region
          _
        $region24: #{tpu_custom_call.1} parent=11 // pred_fallthru
          _
        // Predicated region
        $region25: #{tpu_custom_call.1} parent=11 // pred_check
          %p226 = pneg %p124
        $region26: #{tpu_custom_call.1} parent=11 // pred_check_branch
          %228 = sbr.rel (%p226) target = $region28
        $region27: #{tpu_custom_call.1} parent=11 // pred_region
          _
        $region28: #{tpu_custom_call.1} parent=11 // pred_fallthru
          _
        // Predicated region
        $region29: #{tpu_custom_call.1} parent=11 // pred_check
          %p229 = pneg %p145
        $region30: #{tpu_custom_call.1} parent=11 // pred_check_branch
          %231 = sbr.rel (%p229) target = $region32
        $region31: #{tpu_custom_call.1} parent=11 // pred_region
          _
        $region32: #{tpu_custom_call.1} parent=11 // pred_fallthru
          _
        // Predicated region
        $region33: #{tpu_custom_call.1} parent=11 // pred_check
          %p232 = pneg %p166
        $region34: #{tpu_custom_call.1} parent=11 // pred_check_branch
          %234 = sbr.rel (%p232) target = $region36
        $region35: #{tpu_custom_call.1} parent=11 // pred_region
          _
        $region36: #{tpu_custom_call.1} parent=11 // pred_fallthru
          _
      $region12: #{tpu_custom_call.1} parent=5 // pred_fallthru
        _
      %p235 = scmp.lt.s32.totalorder %s14, 2
      // Predicated region
      $region37: #{tpu_custom_call.1} parent=5 // pred_check
        %p236 = pneg %p235
      $region38: #{tpu_custom_call.1} parent=5 // pred_check_branch
        %238 = sbr.rel (%p236) target = $region40
      $region39: #{tpu_custom_call.1} parent=5 // pred_region
        // Predicated region
        $region41: #{tpu_custom_call.1} parent=39 // pred_check
          %p239 = pneg %p34
        $region42: #{tpu_custom_call.1} parent=39 // pred_check_branch
          %241 = sbr.rel (%p239) target = $region44
        $region43: #{tpu_custom_call.1} parent=39 // pred_region
          %p242 = scmp.lt.s32.totalorder %s14, 1
          %s243 = scalar_select %p242, %s14, 1
          %s244 = smul.addr %s243, 2
          %s245 = smul.addr %s244, 4
          %s246 = scalar_lea.vmem %s0, %s245
        $region44: #{tpu_custom_call.1} parent=39 // pred_fallthru
          _
      $region40: #{tpu_custom_call.1} parent=5 // pred_fallthru
        _
      %p247 = scmp.le.s32.totalorder 1, %s14
      %p248 = scmp.lt.s32.totalorder %s14, 3
      %p249 = pnand %p247, %p248
      %p250 = pneg %p249
      // Predicated region
      $region45: #{tpu_custom_call.1} parent=5 // pred_check
        _
      $region46: #{tpu_custom_call.1} parent=5 // pred_check_branch
        %252 = sbr.rel (%p249) target = $region48
      $region47: #{tpu_custom_call.1} parent=5 // pred_region
        %s253 = ssub.s32 %s14, 1
        // Predicated region
        $region49: #{tpu_custom_call.1} parent=47 // pred_check
          %p254 = pneg %p61
        $region50: #{tpu_custom_call.1} parent=47 // pred_check_branch
          %256 = sbr.rel (%p254) target = $region52
        $region51: #{tpu_custom_call.1} parent=47 // pred_region
          %257 = dma.done [#allocation5], 128
        $region52: #{tpu_custom_call.1} parent=47 // pred_fallthru
          _
        %p258 = scmp.lt.s32.totalorder %s19, 1
        %s259 = scalar_select %p258, %s19, 1
        %s260 = smul.addr %s259, 2
        %s261 = smul.addr %s260, 4
        %s262 = scalar_lea.vmem %s0, %s261
        %p263 = pneg %p40
        %p264 = pneg %p37
        %p265 = pneg %p61
        %p266 = pneg %p58
        %p267 = pneg %p82
        %p268 = pneg %p79
        %p269 = pneg %p103
        %p270 = pneg %p100
        %p271 = pneg %p124
        %p272 = pneg %p121
        %p273 = pneg %p145
        %p274 = pneg %p142
        %p275 = pneg %p166
        %p276 = pneg %p163
        %p277 = pneg %p192
        %p278 = pneg %p189
        %p279 = scmp.lt.s32.totalorder %s19, 1
        %s280 = scalar_select %p279, %s19, 1
        %s281 = smul.addr %s280, 14
        %s282 = smul.addr %s281, 8
        %s283 = scalar_lea.vmem %s7, %s282
        %p284 = scmp.lt.s32.totalorder %s19, 1
        %s285 = scalar_select %p284, %s19, 1
        %s286 = smul.addr %s285, 2
        %s287 = smul.addr %s286, 4
        %s288 = scalar_lea.vmem %s0, %s287
        %p289 = scmp.lt.s32.totalorder %s19, 1
        %s290 = scalar_select %p289, %s19, 1
        %s291 = smul.addr %s290, 14
        %s292 = smul.addr %s291, 8
        %s293 = scalar_lea.vmem %s7, %s292
        %v297 = vlaneseq
        %v298 = vand.u32 %v297, 127
        %v299 = vadd.s32 %v298, 128
        %vm300 = vcmp.lt.s32.totalorder %v298, 0
        %v301 = vsub.s32 0, %v298
        %v302 = vsel %vm300, %v301, %v298
        %v303 = vshrl.u32 %v302, 4
        %v304 = vand.u32 %v302, 15
        %v305 = vsub.s32 0, %v304
        %v306 = vsel %vm300, %v305, %v304
        %vm307 = vcmp.lt.s32.totalorder %v299, 0
        %v308 = vsub.s32 0, %v299
        %v309 = vsel %vm307, %v308, %v299
        %v310 = vshrl.u32 %v309, 4
        %v311 = vand.u32 %v309, 15
        %v312 = vsub.s32 0, %v311
        %v313 = vsel %vm307, %v312, %v311
        %vm314 = vcmp.ne.s32.totalorder %v306, 0
        %vm315 = vcmp.ne.s32.totalorder %v313, 0
        %vm316 = vcmp.lt.s32.totalorder %v306, 0
        %vm317 = vcmp.lt.s32.totalorder %v313, 0
        %vm318 = vmand %vm316, %vm314
        %vm319 = vmand %vm317, %vm315
        %v320 = vadd.s32 %v306, 16
        %v321 = vadd.s32 %v313, 16
        %v322 = vsel %vm318, %v320, %v306
        %v323 = vsel %vm319, %v321, %v313
        %v324 = vld [vmem:[%s288] sm:$0xff]
        %v326 = vcombine.high %v324, %v324
        %328 = vst [vmem:[%s293] sm:$0xf] %v324
        %329 = vst [vmem:[%s293 + $0x8] sm:$0xf] %v326
        %v330 = vpack.c.bf16 %v324, %v324
        %v331 = vpack.c.bf16 %v326, %v326
        %v334 = vunpack.c.l.b16 %v330
        %v335 = vunpack.c.l.b16 %v331
        %v336 = vpack.c.b16 %v335, %v334
        %337 = vrot.lane.b32.xlu0 %v336, 17
        %v338 = vpop.permute.xlu0 %337
        %v339 = vrot.slane %v338, 4
        %vm340 = vcmask 138240
        %v341 = vsel %vm340, %v339, %v338
        %vm344 = vcmask 1041544
        %vm345 = vcmask 1045508
        %vm346 = vmor %vm345, %vm344
        %347 = vst.msk [vmem:[#allocation2] sm:$0x33] %vm346, %v341
        %vm348 = vcmask 132096
        %349 = vst.msk [vmem:[#allocation2 + $0x8] sm:$0x3] %vm348, %v339
        %v350 = vld [vmem:[#allocation2] sm:$0x3]
        %352 = vrot.lane.b32.xlu0 %v350, 96
        %v353 = vpop.permute.xlu0 %352
        %vm355 = vcmask 132104
        %356 = vst.msk [vmem:[#allocation2] sm:$0x3] %vm355, %v353
        %v357 = vld [vmem:[#allocation2 + $0x4] sm:$0x33]
        %359 = vrot.lane.b32.xlu0 %v357, 32
        %v360 = vpop.permute.xlu0 %359
        %v361 = vrot.slane %v360, 4
        %vm362 = vcmask 261120
        %v363 = vsel %vm362, %v360, %v361
        %vm365 = vcmask 263304
        %366 = vst.msk [vmem:[#allocation2 + $0x8] sm:$0x3] %vm365, %v363
        %v367 = vld [vmem:[#allocation2] sm:$0x33]
        %v368 = vld [vmem:[#allocation2 + $0x8] sm:$0x3]
        %vm369 = vcmp.eq.s32.totalorder %v322, 0
        %vm370 = vcmp.eq.s32.totalorder %v323, 0
        %v371 = vsel %vm369, 1, 0
        %v372 = vsel %vm370, 1, 0
        %vm373 = vcmp.eq.s32.totalorder %v371, 1
        %vm374 = vcmp.eq.s32.totalorder %v372, 1
        %vm375 = vmpackc.low %vm374, %vm373
        %v376 = vsel %vm375, 65537, 0
        %377 = vrot.lane.b32.xlu0 %v376, 2
        %v378 = vpop.permute.xlu0 %377
        %v379 = vrot.slane %v378, 4
        %vm380 = vcmask 15360
        %v381 = vsel %vm380, %v379, %v378
        %vm382 = vcmp.ne.s16.totalorder %v381, 0
        %vm383 = vcmp.ne.s16.totalorder %v379, 0
        %385 = vrot.lane.b32.xlu0 %v367, 2
        %v386 = vpop.permute.xlu0 %385
        %v387 = vrot.slane %v386, 4
        %v388 = vsel %vm380, %v387, %v386
        %v391 = vsel %vm382, %v367, %v388
        %v392 = vsel %vm383, %v368, %v387
        %395 = vrot.lane.b32.xlu0 %v391, 126
        %v396 = vpop.permute.xlu0 %395
        %397 = vrot.lane.b32.xlu0 %v392, 126
        %v398 = vpop.permute.xlu0 %397
        %v399 = vrot.slane %v396, 4
        %v400 = vrot.slane %v398, 4
        %vm401 = vcmask 1043456
        %v402 = vsel %vm401, %v399, %v400
        %vm403 = vcmask 1031168
        %v404 = vsel %vm403, %v396, %v402
        %406 = vst [vmem:[#allocation3] sm:$0x33] %v404
        %v408 = vrot.slane %v367, 6
        %v409 = vrot.slane %v368, 6
        %410 = vrot.lane.b32.xlu0 %v408, 127
        %v411 = vpop.permute.xlu0 %410
        %412 = vrot.lane.b32.xlu0 %v409, 127
        %v413 = vpop.permute.xlu0 %412
        %v414 = vrot.slane %v411, 4
        %v415 = vrot.slane %v413, 4
        %v416 = vsel %vm401, %v414, %v415
        %vm417 = vcmask 1039360
        %v418 = vsel %vm417, %v411, %v416
        %420 = vst [vmem:[#allocation3] sm:$0xcc] %v418
        %vm421 = vcmp.eq.s32.totalorder %v322, 15
        %vm422 = vcmp.eq.s32.totalorder %v323, 15
        %v423 = vsel %vm421, 1, 0
        %v424 = vsel %vm422, 1, 0
        %vm425 = vcmp.eq.s32.totalorder %v423, 1
        %vm426 = vcmp.eq.s32.totalorder %v424, 1
        %vm427 = vmpackc.low %vm426, %vm425
        %428 = vrot.lane.b32.xlu0 %v367, 126
        %v429 = vpop.permute.xlu0 %428
        %430 = vrot.lane.b32.xlu0 %v368, 126
        %v431 = vpop.permute.xlu0 %430
        %v432 = vrot.slane %v429, 4
        %v433 = vrot.slane %v431, 4
        %v434 = vsel %vm401, %v432, %v433
        %v435 = vsel %vm403, %v429, %v434
        %v437 = vsel %vm427, %v367, %v435
        %438 = vst [vmem:[#allocation3 + $0x8] sm:$0x33] %v437
        %v439 = vld [vmem:[#allocation2] sm:$0x33]
        %v440 = vld [vmem:[#allocation2 + $0x8] sm:$0x3]
        %441 = vrot.lane.b32.xlu0 %v376, 18
        %v442 = vpop.permute.xlu0 %441
        %v443 = vrot.slane %v442, 4
        %vm444 = vcmask 146432
        %v445 = vsel %vm444, %v443, %v442
        %vm446 = vcmp.ne.s16.totalorder %v445, 0
        %vm447 = vcmp.ne.s16.totalorder %v443, 0
        %450 = vrot.lane.b32.xlu0 %v439, 2
        %v451 = vpop.permute.xlu0 %450
        %452 = vrot.lane.b32.xlu0 %v440, 2
        %v453 = vpop.permute.xlu0 %452
        %v454 = vrot.slane %v451, 4
        %v455 = vsel %vm380, %v454, %v451
        %v456 = vsel %vm380, %v454, %v453
        %v459 = vsel %vm446, %v439, %v455
        %v460 = vsel %vm447, %v440, %v456
        %v463 = vrot.slane %v459, 6
        %v464 = vrot.slane %v460, 6
        %465 = vrot.lane.b32.xlu0 %v463, 110
        %v466 = vpop.permute.xlu0 %465
        %467 = vrot.lane.b32.xlu0 %v464, 110
        %v468 = vpop.permute.xlu0 %467
        %v469 = vrot.slane %v466, 4
        %v470 = vrot.slane %v468, 4
        %v471 = vsel %vm401, %v469, %v470
        %vm472 = vcmask 900096
        %v473 = vsel %vm472, %v466, %v471
        %475 = vst [vmem:[#allocation3 + $0x8] sm:$0xcc] %v473
        %476 = vrot.lane.b32.xlu0 %v439, 111
        %v477 = vpop.permute.xlu0 %476
        %478 = vrot.lane.b32.xlu0 %v440, 111
        %v479 = vpop.permute.xlu0 %478
        %v480 = vrot.slane %v477, 4
        %v481 = vrot.slane %v479, 4
        %v482 = vsel %vm401, %v480, %v481
        %vm483 = vcmask 908288
        %v484 = vsel %vm483, %v477, %v482
        %486 = vst [vmem:[#allocation3 + $0x10] sm:$0x33] %v484
        %v487 = vsel %vm427, 65537, 0
        %488 = vrot.lane.b32.xlu0 %v487, 16
        %v489 = vpop.permute.xlu0 %488
        %v490 = vrot.slane %v489, 4
        %vm491 = vcmask 130048
        %v492 = vsel %vm491, %v490, %v489
        %vm493 = vcmp.ne.s16.totalorder %v492, 0
        %vm494 = vcmp.ne.s16.totalorder %v490, 0
        %495 = vrot.lane.b32.xlu0 %v439, 126
        %v496 = vpop.permute.xlu0 %495
        %497 = vrot.lane.b32.xlu0 %v440, 126
        %v498 = vpop.permute.xlu0 %497
        %v499 = vrot.slane %v496, 4
        %v500 = vrot.slane %v498, 4
        %v501 = vsel %vm401, %v499, %v500
        %v502 = vsel %vm403, %v496, %v501
        %v505 = vsel %vm493, %v439, %v502
        %v506 = vsel %vm494, %v440, %v498
        %v509 = vrot.slane %v505, 6
        %v510 = vrot.slane %v506, 6
        %511 = vrot.lane.b32.xlu0 %v509, 112
        %v512 = vpop.permute.xlu0 %511
        %513 = vrot.lane.b32.xlu0 %v510, 112
        %v514 = vpop.permute.xlu0 %513
        %v515 = vrot.slane %v512, 4
        %v516 = vrot.slane %v514, 4
        %v517 = vsel %vm401, %v515, %v516
        %vm518 = vcmask 916480
        %v519 = vsel %vm518, %v512, %v517
        %521 = vst [vmem:[#allocation3 + $0x10] sm:$0xcc] %v519
        %v522 = vld [vmem:[#allocation2] sm:$0x33]
        %v523 = vld [vmem:[#allocation2 + $0x8] sm:$0x3]
        %524 = vrot.lane.b32.xlu0 %v376, 34
        %v525 = vpop.permute.xlu0 %524
        %v526 = vrot.slane %v525, 4
        %vm527 = vcmask 277504
        %v528 = vsel %vm527, %v526, %v525
        %vm529 = vcmp.ne.s16.totalorder %v528, 0
        %vm530 = vcmp.ne.s16.totalorder %v526, 0
        %533 = vrot.lane.b32.xlu0 %v522, 2
        %v534 = vpop.permute.xlu0 %533
        %535 = vrot.lane.b32.xlu0 %v523, 2
        %v536 = vpop.permute.xlu0 %535
        %v537 = vrot.slane %v534, 4
        %v538 = vsel %vm380, %v537, %v534
        %v539 = vsel %vm380, %v537, %v536
        %v542 = vsel %vm529, %v522, %v538
        %v543 = vsel %vm530, %v523, %v539
        %546 = vrot.lane.b32.xlu0 %v542, 94
        %v547 = vpop.permute.xlu0 %546
        %548 = vrot.lane.b32.xlu0 %v543, 94
        %v549 = vpop.permute.xlu0 %548
        %v550 = vrot.slane %v547, 4
        %v551 = vrot.slane %v549, 4
        %v552 = vsel %vm401, %v550, %v551
        %vm553 = vcmask 769024
        %v554 = vsel %vm553, %v547, %v552
        %556 = vst [vmem:[#allocation3 + $0x18] sm:$0x33] %v554
        %v557 = vrot.slane %v522, 6
        %v558 = vrot.slane %v523, 6
        %559 = vrot.lane.b32.xlu0 %v557, 95
        %v560 = vpop.permute.xlu0 %559
        %561 = vrot.lane.b32.xlu0 %v558, 95
        %v562 = vpop.permute.xlu0 %561
        %v563 = vrot.slane %v560, 4
        %v564 = vrot.slane %v562, 4
        %v565 = vsel %vm401, %v563, %v564
        %vm566 = vcmask 777216
        %v567 = vsel %vm566, %v560, %v565
        %569 = vst [vmem:[#allocation3 + $0x18] sm:$0xcc] %v567
        %570 = vrot.lane.b32.xlu0 %v487, 32
        %v571 = vpop.permute.xlu0 %570
        %v572 = vrot.slane %v571, 4
        %v573 = vsel %vm362, %v572, %v571
        %vm574 = vcmp.ne.s16.totalorder %v573, 0
        %vm575 = vcmp.ne.s16.totalorder %v572, 0
        %576 = vrot.lane.b32.xlu0 %v522, 126
        %v577 = vpop.permute.xlu0 %576
        %578 = vrot.lane.b32.xlu0 %v523, 126
        %v579 = vpop.permute.xlu0 %578
        %v580 = vrot.slane %v577, 4
        %v581 = vrot.slane %v579, 4
        %v582 = vsel %vm401, %v580, %v581
        %v583 = vsel %vm403, %v577, %v582
        %v586 = vsel %vm574, %v522, %v583
        %v587 = vsel %vm575, %v523, %v579
        %590 = vrot.lane.b32.xlu0 %v586, 96
        %v591 = vpop.permute.xlu0 %590
        %592 = vrot.lane.b32.xlu0 %v587, 96
        %v593 = vpop.permute.xlu0 %592
        %v594 = vrot.slane %v591, 4
        %v595 = vrot.slane %v593, 4
        %v596 = vsel %vm401, %v594, %v595
        %vm597 = vcmask 785408
        %v598 = vsel %vm597, %v591, %v596
        %600 = vst [vmem:[#allocation3 + $0x20] sm:$0x33] %v598
        %v601 = vld [vmem:[#allocation4] sm:$0xf]
        %v602 = vld [vmem:[#allocation4 + $0x4] sm:$0xf]
        %v603 = vld [vmem:[#allocation3] sm:$0xff]
        %v604 = vld [vmem:[#allocation3 + $0x8] sm:$0xff]
        %v605 = vld [vmem:[#allocation3 + $0x10] sm:$0xff]
        %v606 = vld [vmem:[#allocation3 + $0x18] sm:$0xff]
        %v607 = vld [vmem:[#allocation3 + $0x20] sm:$0x33]
        %v608 = vld [vmem:[%s2] sm:$0xff]
        %v609 = vld [vmem:[%s2 + $0x8] sm:$0xff]
        %611 = vset.pattern.permute.xlu0 0
        %612 = vperm.xlu0 %611, %v608
        %v613 = vpop.permute.xlu0 %612
        %616 = vset.pattern.permute.xlu0 0
        %617 = vperm.xlu0 %616, %v609
        %v618 = vpop.permute.xlu0 %617
        %v622 = vunpack.c.l.b16 %v601
        %v623 = vunpack.c.l.b16 %v602
        %v624 = vpack.c.b16 %v623, %v622
        %v630 = vunpack.c.l.b16 %v603
        %v631 = vunpack.c.h.b16 %v603
        %v632 = vunpack.c.l.b16 %v604
        %v633 = vunpack.c.h.b16 %v604
        %v634 = vunpack.c.l.b16 %v605
        %v635 = vunpack.c.h.b16 %v605
        %v636 = vunpack.c.l.b16 %v606
        %v637 = vunpack.c.h.b16 %v606
        %v638 = vunpack.c.l.b16 %v607
        %v639 = vunpack.c.h.b16 %v607
        %v640 = vpack.c.b16 %v632, %v630
        %v641 = vpack.c.b16 %v633, %v631
        %v642 = vpack.c.b16 %v636, %v634
        %v643 = vpack.c.b16 %v637, %v635
        %v644 = vpack.c.b16 %v638, %v638
        %v645 = vpack.c.b16 %v639, %v639
        %vm650 = vcmask 293888
        %v652 = vsel %vm650, %v624, 0
        %vm654 = vcmask 1041408
        %v656 = vsel %vm654, %v644, 0
        %v659 = vsel %vm654, %v645, 0
        %661 = vmatprep.subr.bf16.mxu0 0
        %662 = vmatpush1.bf16.msra.mxu0 0
        %663 = vmatprep.subr.bf16.mxu0 0
        %664 = vmatpush1.bf16.msra.mxu0 0
        %665 = vmatprep.subr.bf16.mxu0 0
        %666 = vmatpush1.bf16.msra.mxu0 0
        %667 = vmatprep.subr.bf16.mxu0 0
        %668 = vmatpush1.bf16.msra.mxu0 0
        %669 = vmatprep.subr.bf16.mxu0 0
        %670 = vmatpush1.bf16.msra.mxu0 0
        %671 = vmatprep.subr.bf16.mxu0 %v659
        %672 = vmatpush1.bf16.msra.mxu0 %v656
        %673 = vmatprep.subr.bf16.mxu0 %v643
        %674 = vmatpush1.bf16.msra.mxu0 %v642
        %675 = vmatprep.subr.bf16.mxu0 %v641
        %676 = vmatpush1.bf16.msra.mxu0 %v640
        %677 = vmatprep.subr.bf16.mxu0 0
        %678 = vmatpush2.bf16.msra.mxu0 0
        %679 = vmatprep.subr.bf16.mxu0 0
        %680 = vmatpush2.bf16.msra.mxu0 0
        %681 = vmatprep.subr.bf16.mxu0 0
        %682 = vmatpush2.bf16.msra.mxu0 0
        %683 = vmatprep.subr.bf16.mxu0 0
        %684 = vmatpush2.bf16.msra.mxu0 0
        %685 = vmatprep.subr.bf16.mxu0 0
        %686 = vmatpush2.bf16.msra.mxu0 0
        %687 = vmatprep.subr.bf16.mxu0 0
        %688 = vmatpush2.bf16.msra.mxu0 0
        %689 = vmatprep.subr.bf16.mxu0 0
        %690 = vmatpush2.bf16.msra.mxu0 0
        %691 = vmatprep.subr.bf16.mxu0 0
        %692 = vmatpush2.bf16.msra.mxu0 0
        %693 = vmatprep.mubr.bf16.mxu0 0
        %694 = vmatmul.mubr.bf16.gmra.mxu0 %v652
        %v695 = vpop.f32.mrf.mxu0
        %v696 = vadd.f32 %v613, %v695
        %v697 = vpop.f32.mrf.mxu0
        %v698 = vadd.f32 %v613, %v697
        %v699 = vpop.f32.mrf.mxu0
        %v700 = vadd.f32 %v618, %v699
        %v701 = vpop.f32.mrf.mxu0
        %v702 = vadd.f32 %v618, %v701
        %703 = vdwg.mxu0
        %v704 = vmax.f32 %v696, 0.0
        %v705 = vmax.f32 %v698, 0.0
        %v706 = vmax.f32 %v700, 0.0
        %v707 = vmax.f32 %v702, 0.0
        %vm712 = vcmask 1043456
        %v713 = vrot.slane %v704, 4
        %v714 = vrot.slane %v705, 4
        %v715 = vrot.slane %v706, 4
        %v716 = vsel %vm712, %v713, %v715
        %v717 = vrot.slane %v707, 4
        %v718 = vsel %vm712, %v714, %v717
        %725 = vst [vmem:[%s293] sm:$0xf0] %v713
        %726 = vst [vmem:[%s293 + $0x8] sm:$0xf0] %v714
        %727 = vst [vmem:[%s293 + $0x10] sm:$0xff] %v716
        %728 = vst [vmem:[%s293 + $0x18] sm:$0xff] %v718
        %729 = vst [vmem:[%s293 + $0x20] sm:$0xf] %v715
        %730 = vst [vmem:[%s293 + $0x28] sm:$0xf] %v717
        %v731 = vpack.c.bf16 %v706, %v704
        %v732 = vpack.c.bf16 %v707, %v705
        %v735 = vunpack.c.l.b16 %v731
        %v736 = vunpack.c.l.b16 %v732
        %v737 = vunpack.c.h.b16 %v731
        %v738 = vunpack.c.h.b16 %v732
        %v739 = vpack.c.b16 %v736, %v735
        %v740 = vpack.c.b16 %v738, %v737
        %vm741 = vcmask 1041408
        %vm742 = vcmask 1045508
        %vm743 = vmor %vm741, %vm742
        %v744 = vrot.slane %v739, 6
        %v745 = vrot.slane %v744, 4
        %v746 = vrot.slane %v740, 6
        %v747 = vsel %vm743, %v745, %v746
        %v748 = vrot.slane %v746, 4
        %749 = vrot.lane.b32.xlu0 %v744, 17
        %v750 = vpop.permute.xlu0 %749
        %751 = vrot.lane.b32.xlu0 %v747, 17
        %v752 = vpop.permute.xlu0 %751
        %753 = vrot.lane.b32.xlu0 %v748, 17
        %v754 = vpop.permute.xlu0 %753
        %v755 = vrot.slane %v750, 4
        %v756 = vrot.slane %v752, 4
        %v757 = vrot.slane %v754, 4
        %v758 = vsel %vm340, %v755, %v750
        %v759 = vsel %vm340, %v756, %v752
        %v760 = vsel %vm340, %v757, %v754
        %vm767 = vcmask 1043594
        %vm768 = vcmask 1047558
        %vm769 = vmor %vm768, %vm767
        %770 = vst.msk [vmem:[#allocation2] sm:$0xcc] %vm769, %v758
        %vm771 = vcmask 134146
        %772 = vst.msk [vmem:[#allocation2 + $0x8] sm:$0xc] %vm771, %v755
        %vm773 = vcmask 1043592
        %vm774 = vcmask 1047556
        %vm775 = vmor %vm774, %vm773
        %776 = vst.msk [vmem:[#allocation2 + $0xc] sm:$0xff] %vm775, %v759
        %vm777 = vcmask 134144
        %778 = vst.msk [vmem:[#allocation2 + $0x14] sm:$0xf] %vm777, %v756
        %779 = vst.msk [vmem:[#allocation2 + $0x18] sm:$0x33] %vm346, %v760
        %780 = vst.msk [vmem:[#allocation2 + $0x20] sm:$0x3] %vm348, %v757
        %v781 = vld [vmem:[#allocation2] sm:$0xc]
        %v782 = vld [vmem:[#allocation2 + $0xc] sm:$0xf]
        %v783 = vld [vmem:[#allocation2 + $0x18] sm:$0x3]
        %787 = vrot.lane.b32.xlu0 %v781, 96
        %v788 = vpop.permute.xlu0 %787
        %789 = vrot.lane.b32.xlu0 %v782, 96
        %v790 = vpop.permute.xlu0 %789
        %791 = vrot.lane.b32.xlu0 %v783, 96
        %v792 = vpop.permute.xlu0 %791
        %vm796 = vcmask 134154
        %797 = vst.msk [vmem:[#allocation2] sm:$0xc] %vm796, %v788
        %vm798 = vcmask 134152
        %799 = vst.msk [vmem:[#allocation2 + $0xc] sm:$0xf] %vm798, %v790
        %800 = vst.msk [vmem:[#allocation2 + $0x18] sm:$0x3] %vm355, %v792
        %v801 = vld [vmem:[#allocation2 + $0x4] sm:$0xcc]
        %v802 = vld [vmem:[#allocation2 + $0x10] sm:$0xff]
        %v803 = vld [vmem:[#allocation2 + $0x1c] sm:$0x33]
        %807 = vrot.lane.b32.xlu0 %v801, 32
        %v808 = vpop.permute.xlu0 %807
        %809 = vrot.lane.b32.xlu0 %v802, 32
        %v810 = vpop.permute.xlu0 %809
        %811 = vrot.lane.b32.xlu0 %v803, 32
        %v812 = vpop.permute.xlu0 %811
        %v813 = vrot.slane %v808, 4
        %v814 = vrot.slane %v810, 4
        %v815 = vrot.slane %v812, 4
        %v816 = vsel %vm362, %v808, %v813
        %v817 = vsel %vm362, %v810, %v814
        %v818 = vsel %vm362, %v812, %v815
        %vm822 = vcmask 265354
        %823 = vst.msk [vmem:[#allocation2 + $0x8] sm:$0xc] %vm822, %v816
        %vm824 = vcmask 265352
        %825 = vst.msk [vmem:[#allocation2 + $0x14] sm:$0xf] %vm824, %v817
        %826 = vst.msk [vmem:[#allocation2 + $0x20] sm:$0x3] %vm365, %v818
        %v827 = vld [vmem:[#allocation2] sm:$0xcc]
        %v828 = vld [vmem:[#allocation2 + $0xc] sm:$0xff]
        %v829 = vld [vmem:[#allocation2 + $0x18] sm:$0x33]
        %v830 = vld [vmem:[#allocation2 + $0x8] sm:$0xc]
        %v831 = vld [vmem:[#allocation2 + $0x14] sm:$0xf]
        %v832 = vld [vmem:[#allocation2 + $0x20] sm:$0x3]
        %836 = vrot.lane.b32.xlu0 %v827, 2
        %v837 = vpop.permute.xlu0 %836
        %838 = vrot.lane.b32.xlu0 %v828, 2
        %v839 = vpop.permute.xlu0 %838
        %840 = vrot.lane.b32.xlu0 %v829, 2
        %v841 = vpop.permute.xlu0 %840
        %v842 = vrot.slane %v837, 4
        %v843 = vrot.slane %v839, 4
        %v844 = vrot.slane %v841, 4
        %v845 = vsel %vm380, %v842, %v837
        %v846 = vsel %vm380, %v843, %v839
        %v847 = vsel %vm380, %v844, %v841
        %v854 = vsel %vm382, %v827, %v845
        %v855 = vsel %vm383, %v830, %v842
        %v856 = vsel %vm382, %v828, %v846
        %v857 = vsel %vm383, %v831, %v843
        %v858 = vsel %vm382, %v829, %v847
        %v859 = vsel %vm383, %v832, %v844
        %866 = vrot.lane.b32.xlu0 %v854, 126
        %v867 = vpop.permute.xlu0 %866
        %868 = vrot.lane.b32.xlu0 %v855, 126
        %v869 = vpop.permute.xlu0 %868
        %870 = vrot.lane.b32.xlu0 %v856, 126
        %v871 = vpop.permute.xlu0 %870
        %872 = vrot.lane.b32.xlu0 %v857, 126
        %v873 = vpop.permute.xlu0 %872
        %874 = vrot.lane.b32.xlu0 %v858, 126
        %v875 = vpop.permute.xlu0 %874
        %876 = vrot.lane.b32.xlu0 %v859, 126
        %v877 = vpop.permute.xlu0 %876
        %v878 = vrot.slane %v867, 4
        %v879 = vrot.slane %v869, 4
        %v880 = vrot.slane %v871, 4
        %v881 = vrot.slane %v873, 4
        %v882 = vrot.slane %v875, 4
        %v883 = vrot.slane %v877, 4
        %v884 = vsel %vm401, %v878, %v879
        %v885 = vsel %vm403, %v867, %v884
        %v886 = vsel %vm401, %v880, %v881
        %v887 = vsel %vm403, %v871, %v886
        %v888 = vsel %vm401, %v882, %v883
        %v889 = vsel %vm403, %v875, %v888
        %893 = vst [vmem:[#allocation3 + $0x20] sm:$0xcc] %v885
        %894 = vst [vmem:[#allocation3 + $0x28] sm:$0xff] %v887
        %895 = vst [vmem:[#allocation3 + $0x30] sm:$0x33] %v889
        %899 = vrot.lane.b32.xlu0 %v827, 127
        %v900 = vpop.permute.xlu0 %899
        %901 = vrot.lane.b32.xlu0 %v830, 127
        %v902 = vpop.permute.xlu0 %901
        %903 = vrot.lane.b32.xlu0 %v828, 127
        %v904 = vpop.permute.xlu0 %903
        %905 = vrot.lane.b32.xlu0 %v831, 127
        %v906 = vpop.permute.xlu0 %905
        %907 = vrot.lane.b32.xlu0 %v829, 127
        %v908 = vpop.permute.xlu0 %907
        %909 = vrot.lane.b32.xlu0 %v832, 127
        %v910 = vpop.permute.xlu0 %909
        %v911 = vrot.slane %v900, 4
        %v912 = vrot.slane %v902, 4
        %v913 = vrot.slane %v904, 4
        %v914 = vrot.slane %v906, 4
        %v915 = vrot.slane %v908, 4
        %v916 = vrot.slane %v910, 4
        %v917 = vsel %vm401, %v911, %v912
        %v918 = vsel %vm417, %v900, %v917
        %v919 = vsel %vm401, %v913, %v914
        %v920 = vsel %vm417, %v904, %v919
        %v921 = vsel %vm401, %v915, %v916
        %v922 = vsel %vm417, %v908, %v921
        %926 = vst [vmem:[#allocation3 + $0x30] sm:$0xcc] %v918
        %927 = vst [vmem:[#allocation3 + $0x38] sm:$0xff] %v920
        %928 = vst [vmem:[#allocation3 + $0x40] sm:$0x33] %v922
        %929 = vrot.lane.b32.xlu0 %v827, 126
        %v930 = vpop.permute.xlu0 %929
        %931 = vrot.lane.b32.xlu0 %v830, 126
        %v932 = vpop.permute.xlu0 %931
        %933 = vrot.lane.b32.xlu0 %v828, 126
        %v934 = vpop.permute.xlu0 %933
        %935 = vrot.lane.b32.xlu0 %v831, 126
        %v936 = vpop.permute.xlu0 %935
        %937 = vrot.lane.b32.xlu0 %v829, 126
        %v938 = vpop.permute.xlu0 %937
        %939 = vrot.lane.b32.xlu0 %v832, 126
        %v940 = vpop.permute.xlu0 %939
        %v941 = vrot.slane %v930, 4
        %v942 = vrot.slane %v932, 4
        %v943 = vrot.slane %v934, 4
        %v944 = vrot.slane %v936, 4
        %v945 = vrot.slane %v938, 4
        %v946 = vrot.slane %v940, 4
        %v947 = vsel %vm401, %v941, %v942
        %v948 = vsel %vm403, %v930, %v947
        %v949 = vsel %vm401, %v943, %v944
        %v950 = vsel %vm403, %v934, %v949
        %v951 = vsel %vm401, %v945, %v946
        %v952 = vsel %vm403, %v938, %v951
        %v956 = vsel %vm427, %v827, %v948
        %v957 = vsel %vm427, %v828, %v950
        %v958 = vsel %vm427, %v829, %v952
        %959 = vst [vmem:[#allocation3 + $0x40] sm:$0xcc] %v956
        %960 = vst [vmem:[#allocation3 + $0x48] sm:$0xff] %v957
        %961 = vst [vmem:[#allocation3 + $0x50] sm:$0x33] %v958
        %v962 = vld [vmem:[#allocation2] sm:$0xcc]
        %v963 = vld [vmem:[#allocation2 + $0x8] sm:$0xc]
        %v964 = vld [vmem:[#allocation2 + $0xc] sm:$0xff]
        %v965 = vld [vmem:[#allocation2 + $0x14] sm:$0xf]
        %v966 = vld [vmem:[#allocation2 + $0x18] sm:$0x33]
        %v967 = vld [vmem:[#allocation2 + $0x20] sm:$0x3]
        %974 = vrot.lane.b32.xlu0 %v962, 2
        %v975 = vpop.permute.xlu0 %974
        %976 = vrot.lane.b32.xlu0 %v963, 2
        %v977 = vpop.permute.xlu0 %976
        %978 = vrot.lane.b32.xlu0 %v964, 2
        %v979 = vpop.permute.xlu0 %978
        %980 = vrot.lane.b32.xlu0 %v965, 2
        %v981 = vpop.permute.xlu0 %980
        %982 = vrot.lane.b32.xlu0 %v966, 2
        %v983 = vpop.permute.xlu0 %982
        %984 = vrot.lane.b32.xlu0 %v967, 2
        %v985 = vpop.permute.xlu0 %984
        %v986 = vrot.slane %v975, 4
        %v987 = vrot.slane %v979, 4
        %v988 = vrot.slane %v983, 4
        %v989 = vsel %vm380, %v986, %v975
        %v990 = vsel %vm380, %v986, %v977
        %v991 = vsel %vm380, %v987, %v979
        %v992 = vsel %vm380, %v987, %v981
        %v993 = vsel %vm380, %v988, %v983
        %v994 = vsel %vm380, %v988, %v985
        %v1001 = vsel %vm446, %v962, %v989
        %v1002 = vsel %vm447, %v963, %v990
        %v1003 = vsel %vm446, %v964, %v991
        %v1004 = vsel %vm447, %v965, %v992
        %v1005 = vsel %vm446, %v966, %v993
        %v1006 = vsel %vm447, %v967, %v994
        %1013 = vrot.lane.b32.xlu0 %v1001, 110
        %v1014 = vpop.permute.xlu0 %1013
        %1015 = vrot.lane.b32.xlu0 %v1002, 110
        %v1016 = vpop.permute.xlu0 %1015
        %1017 = vrot.lane.b32.xlu0 %v1003, 110
        %v1018 = vpop.permute.xlu0 %1017
        %1019 = vrot.lane.b32.xlu0 %v1004, 110
        %v1020 = vpop.permute.xlu0 %1019
        %1021 = vrot.lane.b32.xlu0 %v1005, 110
        %v1022 = vpop.permute.xlu0 %1021
        %1023 = vrot.lane.b32.xlu0 %v1006, 110
        %v1024 = vpop.permute.xlu0 %1023
        %v1025 = vrot.slane %v1014, 4
        %v1026 = vrot.slane %v1016, 4
        %v1027 = vrot.slane %v1018, 4
        %v1028 = vrot.slane %v1020, 4
        %v1029 = vrot.slane %v1022, 4
        %v1030 = vrot.slane %v1024, 4
        %v1031 = vsel %vm401, %v1025, %v1026
        %v1032 = vsel %vm472, %v1014, %v1031
        %v1033 = vsel %vm401, %v1027, %v1028
        %v1034 = vsel %vm472, %v1018, %v1033
        %v1035 = vsel %vm401, %v1029, %v1030
        %v1036 = vsel %vm472, %v1022, %v1035
        %1040 = vst [vmem:[#allocation3 + $0x50] sm:$0xcc] %v1032
        %1041 = vst [vmem:[#allocation3 + $0x58] sm:$0xff] %v1034
        %1042 = vst [vmem:[#allocation3 + $0x60] sm:$0x33] %v1036
        %1043 = vrot.lane.b32.xlu0 %v962, 111
        %v1044 = vpop.permute.xlu0 %1043
        %1045 = vrot.lane.b32.xlu0 %v963, 111
        %v1046 = vpop.permute.xlu0 %1045
        %1047 = vrot.lane.b32.xlu0 %v964, 111
        %v1048 = vpop.permute.xlu0 %1047
        %1049 = vrot.lane.b32.xlu0 %v965, 111
        %v1050 = vpop.permute.xlu0 %1049
        %1051 = vrot.lane.b32.xlu0 %v966, 111
        %v1052 = vpop.permute.xlu0 %1051
        %1053 = vrot.lane.b32.xlu0 %v967, 111
        %v1054 = vpop.permute.xlu0 %1053
        %v1055 = vrot.slane %v1044, 4
        %v1056 = vrot.slane %v1046, 4
        %v1057 = vrot.slane %v1048, 4
        %v1058 = vrot.slane %v1050, 4
        %v1059 = vrot.slane %v1052, 4
        %v1060 = vrot.slane %v1054, 4
        %v1061 = vsel %vm401, %v1055, %v1056
        %v1062 = vsel %vm483, %v1044, %v1061
        %v1063 = vsel %vm401, %v1057, %v1058
        %v1064 = vsel %vm483, %v1048, %v1063
        %v1065 = vsel %vm401, %v1059, %v1060
        %v1066 = vsel %vm483, %v1052, %v1065
        %1070 = vst [vmem:[#allocation3 + $0x60] sm:$0xcc] %v1062
        %1071 = vst [vmem:[#allocation3 + $0x68] sm:$0xff] %v1064
        %1072 = vst [vmem:[#allocation3 + $0x70] sm:$0x33] %v1066
        %1073 = vrot.lane.b32.xlu0 %v962, 126
        %v1074 = vpop.permute.xlu0 %1073
        %1075 = vrot.lane.b32.xlu0 %v963, 126
        %v1076 = vpop.permute.xlu0 %1075
        %1077 = vrot.lane.b32.xlu0 %v964, 126
        %v1078 = vpop.permute.xlu0 %1077
        %1079 = vrot.lane.b32.xlu0 %v965, 126
        %v1080 = vpop.permute.xlu0 %1079
        %1081 = vrot.lane.b32.xlu0 %v966, 126
        %v1082 = vpop.permute.xlu0 %1081
        %1083 = vrot.lane.b32.xlu0 %v967, 126
        %v1084 = vpop.permute.xlu0 %1083
        %v1085 = vrot.slane %v1074, 4
        %v1086 = vrot.slane %v1076, 4
        %v1087 = vrot.slane %v1078, 4
        %v1088 = vrot.slane %v1080, 4
        %v1089 = vrot.slane %v1082, 4
        %v1090 = vrot.slane %v1084, 4
        %v1091 = vsel %vm401, %v1085, %v1086
        %v1092 = vsel %vm403, %v1074, %v1091
        %v1093 = vsel %vm401, %v1087, %v1088
        %v1094 = vsel %vm403, %v1078, %v1093
        %v1095 = vsel %vm401, %v1089, %v1090
        %v1096 = vsel %vm403, %v1082, %v1095
        %v1103 = vsel %vm493, %v962, %v1092
        %v1104 = vsel %vm494, %v963, %v1076
        %v1105 = vsel %vm493, %v964, %v1094
        %v1106 = vsel %vm494, %v965, %v1080
        %v1107 = vsel %vm493, %v966, %v1096
        %v1108 = vsel %vm494, %v967, %v1084
        %1115 = vrot.lane.b32.xlu0 %v1103, 112
        %v1116 = vpop.permute.xlu0 %1115
        %1117 = vrot.lane.b32.xlu0 %v1104, 112
        %v1118 = vpop.permute.xlu0 %1117
        %1119 = vrot.lane.b32.xlu0 %v1105, 112
        %v1120 = vpop.permute.xlu0 %1119
        %1121 = vrot.lane.b32.xlu0 %v1106, 112
        %v1122 = vpop.permute.xlu0 %1121
        %1123 = vrot.lane.b32.xlu0 %v1107, 112
        %v1124 = vpop.permute.xlu0 %1123
        %1125 = vrot.lane.b32.xlu0 %v1108, 112
        %v1126 = vpop.permute.xlu0 %1125
        %v1127 = vrot.slane %v1116, 4
        %v1128 = vrot.slane %v1118, 4
        %v1129 = vrot.slane %v1120, 4
        %v1130 = vrot.slane %v1122, 4
        %v1131 = vrot.slane %v1124, 4
        %v1132 = vrot.slane %v1126, 4
        %v1133 = vsel %vm401, %v1127, %v1128
        %v1134 = vsel %vm518, %v1116, %v1133
        %v1135 = vsel %vm401, %v1129, %v1130
        %v1136 = vsel %vm518, %v1120, %v1135
        %v1137 = vsel %vm401, %v1131, %v1132
        %v1138 = vsel %vm518, %v1124, %v1137
        %1142 = vst [vmem:[#allocation3 + $0x70] sm:$0xcc] %v1134
        %1143 = vst [vmem:[#allocation3 + $0x78] sm:$0xff] %v1136
        %1144 = vst [vmem:[#allocation3 + $0x80] sm:$0x33] %v1138
        %v1145 = vld [vmem:[#allocation2] sm:$0xcc]
        %v1146 = vld [vmem:[#allocation2 + $0x8] sm:$0xc]
        %v1147 = vld [vmem:[#allocation2 + $0xc] sm:$0xff]
        %v1148 = vld [vmem:[#allocation2 + $0x14] sm:$0xf]
        %v1149 = vld [vmem:[#allocation2 + $0x18] sm:$0x33]
        %v1150 = vld [vmem:[#allocation2 + $0x20] sm:$0x3]
        %1157 = vrot.lane.b32.xlu0 %v1145, 2
        %v1158 = vpop.permute.xlu0 %1157
        %1159 = vrot.lane.b32.xlu0 %v1146, 2
        %v1160 = vpop.permute.xlu0 %1159
        %1161 = vrot.lane.b32.xlu0 %v1147, 2
        %v1162 = vpop.permute.xlu0 %1161
        %1163 = vrot.lane.b32.xlu0 %v1148, 2
        %v1164 = vpop.permute.xlu0 %1163
        %1165 = vrot.lane.b32.xlu0 %v1149, 2
        %v1166 = vpop.permute.xlu0 %1165
        %1167 = vrot.lane.b32.xlu0 %v1150, 2
        %v1168 = vpop.permute.xlu0 %1167
        %v1169 = vrot.slane %v1158, 4
        %v1170 = vrot.slane %v1162, 4
        %v1171 = vrot.slane %v1166, 4
        %v1172 = vsel %vm380, %v1169, %v1158
        %v1173 = vsel %vm380, %v1169, %v1160
        %v1174 = vsel %vm380, %v1170, %v1162
        %v1175 = vsel %vm380, %v1170, %v1164
        %v1176 = vsel %vm380, %v1171, %v1166
        %v1177 = vsel %vm380, %v1171, %v1168
        %v1184 = vsel %vm529, %v1145, %v1172
        %v1185 = vsel %vm530, %v1146, %v1173
        %v1186 = vsel %vm529, %v1147, %v1174
        %v1187 = vsel %vm530, %v1148, %v1175
        %v1188 = vsel %vm529, %v1149, %v1176
        %v1189 = vsel %vm530, %v1150, %v1177
        %1196 = vrot.lane.b32.xlu0 %v1184, 94
        %v1197 = vpop.permute.xlu0 %1196
        %1198 = vrot.lane.b32.xlu0 %v1185, 94
        %v1199 = vpop.permute.xlu0 %1198
        %1200 = vrot.lane.b32.xlu0 %v1186, 94
        %v1201 = vpop.permute.xlu0 %1200
        %1202 = vrot.lane.b32.xlu0 %v1187, 94
        %v1203 = vpop.permute.xlu0 %1202
        %1204 = vrot.lane.b32.xlu0 %v1188, 94
        %v1205 = vpop.permute.xlu0 %1204
        %1206 = vrot.lane.b32.xlu0 %v1189, 94
        %v1207 = vpop.permute.xlu0 %1206
        %v1208 = vrot.slane %v1197, 4
        %v1209 = vrot.slane %v1199, 4
        %v1210 = vrot.slane %v1201, 4
        %v1211 = vrot.slane %v1203, 4
        %v1212 = vrot.slane %v1205, 4
        %v1213 = vrot.slane %v1207, 4
        %v1214 = vsel %vm401, %v1208, %v1209
        %v1215 = vsel %vm553, %v1197, %v1214
        %v1216 = vsel %vm401, %v1210, %v1211
        %v1217 = vsel %vm553, %v1201, %v1216
        %v1218 = vsel %vm401, %v1212, %v1213
        %v1219 = vsel %vm553, %v1205, %v1218
        %1223 = vst [vmem:[#allocation3 + $0x80] sm:$0xcc] %v1215
        %1224 = vst [vmem:[#allocation3 + $0x88] sm:$0xff] %v1217
        %1225 = vst [vmem:[#allocation3 + $0x90] sm:$0x33] %v1219
        %1226 = vrot.lane.b32.xlu0 %v1145, 95
        %v1227 = vpop.permute.xlu0 %1226
        %1228 = vrot.lane.b32.xlu0 %v1146, 95
        %v1229 = vpop.permute.xlu0 %1228
        %1230 = vrot.lane.b32.xlu0 %v1147, 95
        %v1231 = vpop.permute.xlu0 %1230
        %1232 = vrot.lane.b32.xlu0 %v1148, 95
        %v1233 = vpop.permute.xlu0 %1232
        %1234 = vrot.lane.b32.xlu0 %v1149, 95
        %v1235 = vpop.permute.xlu0 %1234
        %1236 = vrot.lane.b32.xlu0 %v1150, 95
        %v1237 = vpop.permute.xlu0 %1236
        %v1238 = vrot.slane %v1227, 4
        %v1239 = vrot.slane %v1229, 4
        %v1240 = vrot.slane %v1231, 4
        %v1241 = vrot.slane %v1233, 4
        %v1242 = vrot.slane %v1235, 4
        %v1243 = vrot.slane %v1237, 4
        %v1244 = vsel %vm401, %v1238, %v1239
        %v1245 = vsel %vm566, %v1227, %v1244
        %v1246 = vsel %vm401, %v1240, %v1241
        %v1247 = vsel %vm566, %v1231, %v1246
        %v1248 = vsel %vm401, %v1242, %v1243
        %v1249 = vsel %vm566, %v1235, %v1248
        %1253 = vst [vmem:[#allocation3 + $0x90] sm:$0xcc] %v1245
        %1254 = vst [vmem:[#allocation3 + $0x98] sm:$0xff] %v1247
        %1255 = vst [vmem:[#allocation3 + $0xa0] sm:$0x33] %v1249
        %1256 = vrot.lane.b32.xlu0 %v1145, 126
        %v1257 = vpop.permute.xlu0 %1256
        %1258 = vrot.lane.b32.xlu0 %v1146, 126
        %v1259 = vpop.permute.xlu0 %1258
        %1260 = vrot.lane.b32.xlu0 %v1147, 126
        %v1261 = vpop.permute.xlu0 %1260
        %1262 = vrot.lane.b32.xlu0 %v1148, 126
        %v1263 = vpop.permute.xlu0 %1262
        %1264 = vrot.lane.b32.xlu0 %v1149, 126
        %v1265 = vpop.permute.xlu0 %1264
        %1266 = vrot.lane.b32.xlu0 %v1150, 126
        %v1267 = vpop.permute.xlu0 %1266
        %v1268 = vrot.slane %v1257, 4
        %v1269 = vrot.slane %v1259, 4
        %v1270 = vrot.slane %v1261, 4
        %v1271 = vrot.slane %v1263, 4
        %v1272 = vrot.slane %v1265, 4
        %v1273 = vrot.slane %v1267, 4
        %v1274 = vsel %vm401, %v1268, %v1269
        %v1275 = vsel %vm403, %v1257, %v1274
        %v1276 = vsel %vm401, %v1270, %v1271
        %v1277 = vsel %vm403, %v1261, %v1276
        %v1278 = vsel %vm401, %v1272, %v1273
        %v1279 = vsel %vm403, %v1265, %v1278
        %v1286 = vsel %vm574, %v1145, %v1275
        %v1287 = vsel %vm575, %v1146, %v1259
        %v1288 = vsel %vm574, %v1147, %v1277
        %v1289 = vsel %vm575, %v1148, %v1263
        %v1290 = vsel %vm574, %v1149, %v1279
        %v1291 = vsel %vm575, %v1150, %v1267
        %1298 = vrot.lane.b32.xlu0 %v1286, 96
        %v1299 = vpop.permute.xlu0 %1298
        %1300 = vrot.lane.b32.xlu0 %v1287, 96
        %v1301 = vpop.permute.xlu0 %1300
        %1302 = vrot.lane.b32.xlu0 %v1288, 96
        %v1303 = vpop.permute.xlu0 %1302
        %1304 = vrot.lane.b32.xlu0 %v1289, 96
        %v1305 = vpop.permute.xlu0 %1304
        %1306 = vrot.lane.b32.xlu0 %v1290, 96
        %v1307 = vpop.permute.xlu0 %1306
        %1308 = vrot.lane.b32.xlu0 %v1291, 96
        %v1309 = vpop.permute.xlu0 %1308
        %v1310 = vrot.slane %v1299, 4
        %v1311 = vrot.slane %v1301, 4
        %v1312 = vrot.slane %v1303, 4
        %v1313 = vrot.slane %v1305, 4
        %v1314 = vrot.slane %v1307, 4
        %v1315 = vrot.slane %v1309, 4
        %v1316 = vsel %vm401, %v1310, %v1311
        %v1317 = vsel %vm597, %v1299, %v1316
        %v1318 = vsel %vm401, %v1312, %v1313
        %v1319 = vsel %vm597, %v1303, %v1318
        %v1320 = vsel %vm401, %v1314, %v1315
        %v1321 = vsel %vm597, %v1307, %v1320
        %1325 = vst [vmem:[#allocation3 + $0xa0] sm:$0xcc] %v1317
        %1326 = vst [vmem:[#allocation3 + $0xa8] sm:$0xff] %v1319
        %1327 = vst [vmem:[#allocation3 + $0xb0] sm:$0x33] %v1321
        %v1328 = vld [vmem:[%s3] sm:$0xff]
        %v1329 = vld [vmem:[%s3 + $0x8] sm:$0xff]
        %v1330 = vld [vmem:[#allocation3] sm:$0xff]
        %v1331 = vld [vmem:[#allocation3 + $0x8] sm:$0xff]
        %v1332 = vld [vmem:[#allocation3 + $0x10] sm:$0xff]
        %v1333 = vld [vmem:[#allocation3 + $0x18] sm:$0xff]
        %v1334 = vld [vmem:[#allocation3 + $0x20] sm:$0xff]
        %v1335 = vld [vmem:[#allocation3 + $0x28] sm:$0xff]
        %v1336 = vld [vmem:[#allocation3 + $0x30] sm:$0xff]
        %v1337 = vld [vmem:[#allocation3 + $0x38] sm:$0xff]
        %v1338 = vld [vmem:[#allocation3 + $0x40] sm:$0xff]
        %v1339 = vld [vmem:[#allocation3 + $0x48] sm:$0xff]
        %v1340 = vld [vmem:[#allocation3 + $0x50] sm:$0xff]
        %v1341 = vld [vmem:[#allocation3 + $0x58] sm:$0xff]
        %v1342 = vld [vmem:[#allocation3 + $0x60] sm:$0xff]
        %v1343 = vld [vmem:[#allocation3 + $0x68] sm:$0xff]
        %v1344 = vld [vmem:[#allocation3 + $0x70] sm:$0xff]
        %v1345 = vld [vmem:[#allocation3 + $0x78] sm:$0xff]
        %v1346 = vld [vmem:[#allocation3 + $0x80] sm:$0xff]
        %v1347 = vld [vmem:[#allocation3 + $0x88] sm:$0xff]
        %v1348 = vld [vmem:[#allocation3 + $0x90] sm:$0xff]
        %v1349 = vld [vmem:[#allocation3 + $0x98] sm:$0xff]
        %v1350 = vld [vmem:[#allocation3 + $0xa0] sm:$0xff]
        %v1351 = vld [vmem:[#allocation3 + $0xa8] sm:$0xff]
        %v1352 = vld [vmem:[#allocation3 + $0xb0] sm:$0x33]
        %v1353 = vld [vmem:[%s4] sm:$0xff]
        %v1354 = vld [vmem:[%s4 + $0x8] sm:$0xff]
        %1356 = vset.pattern.permute.xlu0 0
        %1357 = vperm.xlu0 %1356, %v1353
        %v1358 = vpop.permute.xlu0 %1357
        %1361 = vset.pattern.permute.xlu0 0
        %1362 = vperm.xlu0 %1361, %v1354
        %v1363 = vpop.permute.xlu0 %1362
        %v1367 = vunpack.c.l.b16 %v1328
        %v1368 = vunpack.c.h.b16 %v1328
        %v1369 = vunpack.c.l.b16 %v1329
        %v1370 = vunpack.c.h.b16 %v1329
        %v1371 = vpack.c.b16 %v1369, %v1367
        %v1372 = vpack.c.b16 %v1370, %v1368
        %v1397 = vunpack.c.l.b16 %v1330
        %v1398 = vunpack.c.h.b16 %v1330
        %v1399 = vunpack.c.l.b16 %v1331
        %v1400 = vunpack.c.h.b16 %v1331
        %v1401 = vunpack.c.l.b16 %v1332
        %v1402 = vunpack.c.h.b16 %v1332
        %v1403 = vunpack.c.l.b16 %v1333
        %v1404 = vunpack.c.h.b16 %v1333
        %v1405 = vunpack.c.l.b16 %v1334
        %v1406 = vunpack.c.h.b16 %v1334
        %v1407 = vunpack.c.l.b16 %v1335
        %v1408 = vunpack.c.h.b16 %v1335
        %v1409 = vunpack.c.l.b16 %v1336
        %v1410 = vunpack.c.h.b16 %v1336
        %v1411 = vunpack.c.l.b16 %v1337
        %v1412 = vunpack.c.h.b16 %v1337
        %v1413 = vunpack.c.l.b16 %v1338
        %v1414 = vunpack.c.h.b16 %v1338
        %v1415 = vunpack.c.l.b16 %v1339
        %v1416 = vunpack.c.h.b16 %v1339
        %v1417 = vunpack.c.l.b16 %v1340
        %v1418 = vunpack.c.h.b16 %v1340
        %v1419 = vunpack.c.l.b16 %v1341
        %v1420 = vunpack.c.h.b16 %v1341
        %v1421 = vunpack.c.l.b16 %v1342
        %v1422 = vunpack.c.h.b16 %v1342
        %v1423 = vunpack.c.l.b16 %v1343
        %v1424 = vunpack.c.h.b16 %v1343
        %v1425 = vunpack.c.l.b16 %v1344
        %v1426 = vunpack.c.h.b16 %v1344
        %v1427 = vunpack.c.l.b16 %v1345
        %v1428 = vunpack.c.h.b16 %v1345
        %v1429 = vunpack.c.l.b16 %v1346
        %v1430 = vunpack.c.h.b16 %v1346
        %v1431 = vunpack.c.l.b16 %v1347
        %v1432 = vunpack.c.h.b16 %v1347
        %v1433 = vunpack.c.l.b16 %v1348
        %v1434 = vunpack.c.h.b16 %v1348
        %v1435 = vunpack.c.l.b16 %v1349
        %v1436 = vunpack.c.h.b16 %v1349
        %v1437 = vunpack.c.l.b16 %v1350
        %v1438 = vunpack.c.h.b16 %v1350
        %v1439 = vunpack.c.l.b16 %v1351
        %v1440 = vunpack.c.h.b16 %v1351
        %v1441 = vunpack.c.l.b16 %v1352
        %v1442 = vunpack.c.h.b16 %v1352
        %v1443 = vpack.c.b16 %v1399, %v1397
        %v1444 = vpack.c.b16 %v1400, %v1398
        %v1445 = vpack.c.b16 %v1403, %v1401
        %v1446 = vpack.c.b16 %v1404, %v1402
        %v1447 = vpack.c.b16 %v1407, %v1405
        %v1448 = vpack.c.b16 %v1408, %v1406
        %v1449 = vpack.c.b16 %v1411, %v1409
        %v1450 = vpack.c.b16 %v1412, %v1410
        %v1451 = vpack.c.b16 %v1415, %v1413
        %v1452 = vpack.c.b16 %v1416, %v1414
        %v1453 = vpack.c.b16 %v1419, %v1417
        %v1454 = vpack.c.b16 %v1420, %v1418
        %v1455 = vpack.c.b16 %v1423, %v1421
        %v1456 = vpack.c.b16 %v1424, %v1422
        %v1457 = vpack.c.b16 %v1427, %v1425
        %v1458 = vpack.c.b16 %v1428, %v1426
        %v1459 = vpack.c.b16 %v1431, %v1429
        %v1460 = vpack.c.b16 %v1432, %v1430
        %v1461 = vpack.c.b16 %v1435, %v1433
        %v1462 = vpack.c.b16 %v1436, %v1434
        %v1463 = vpack.c.b16 %v1439, %v1437
        %v1464 = vpack.c.b16 %v1440, %v1438
        %v1465 = vpack.c.b16 %v1441, %v1441
        %v1466 = vpack.c.b16 %v1442, %v1442
        %vm1489 = vcmask 424960
        %v1491 = vsel %vm1489, %v1372, 0
        %v1494 = vsel %vm654, %v1465, 0
        %v1497 = vsel %vm654, %v1466, 0
        %1499 = vmatprep.subr.bf16.mxu0 %v1458
        %1500 = vmatpush1.bf16.msra.mxu0 %v1457
        %1501 = vmatprep.subr.bf16.mxu0 %v1456
        %1502 = vmatpush1.bf16.msra.mxu0 %v1455
        %1503 = vmatprep.subr.bf16.mxu0 %v1454
        %1504 = vmatpush1.bf16.msra.mxu0 %v1453
        %1505 = vmatprep.subr.bf16.mxu0 %v1452
        %1506 = vmatpush1.bf16.msra.mxu0 %v1451
        %1507 = vmatprep.subr.bf16.mxu0 %v1450
        %1508 = vmatpush1.bf16.msra.mxu0 %v1449
        %1509 = vmatprep.subr.bf16.mxu0 %v1448
        %1510 = vmatpush1.bf16.msra.mxu0 %v1447
        %1511 = vmatprep.subr.bf16.mxu0 %v1446
        %1512 = vmatpush1.bf16.msra.mxu0 %v1445
        %1513 = vmatprep.subr.bf16.mxu0 %v1444
        %1514 = vmatpush1.bf16.msra.mxu0 %v1443
        %1515 = vmatprep.subr.bf16.mxu0 0
        %1516 = vmatpush2.bf16.msra.mxu0 0
        %1517 = vmatprep.subr.bf16.mxu0 0
        %1518 = vmatpush2.bf16.msra.mxu0 0
        %1519 = vmatprep.subr.bf16.mxu0 0
        %1520 = vmatpush2.bf16.msra.mxu0 0
        %1521 = vmatprep.subr.bf16.mxu0 0
        %1522 = vmatpush2.bf16.msra.mxu0 0
        %1523 = vmatprep.subr.bf16.mxu0 %v1497
        %1524 = vmatpush2.bf16.msra.mxu0 %v1494
        %1525 = vmatprep.subr.bf16.mxu0 %v1464
        %1526 = vmatpush2.bf16.msra.mxu0 %v1463
        %1527 = vmatprep.subr.bf16.mxu0 %v1462
        %1528 = vmatpush2.bf16.msra.mxu0 %v1461
        %1529 = vmatprep.subr.bf16.mxu0 %v1460
        %1530 = vmatpush2.bf16.msra.mxu0 %v1459
        %1531 = vmatprep.mubr.bf16.mxu0 %v1491
        %1532 = vmatmul.mubr.bf16.gmra.mxu0 %v1371
        %v1533 = vpop.f32.mrf.mxu0
        %v1534 = vadd.f32 %v1358, %v1533
        %v1535 = vpop.f32.mrf.mxu0
        %v1536 = vadd.f32 %v1358, %v1535
        %v1537 = vpop.f32.mrf.mxu0
        %v1538 = vadd.f32 %v1363, %v1537
        %v1539 = vpop.f32.mrf.mxu0
        %v1540 = vadd.f32 %v1363, %v1539
        %1541 = vdwg.mxu0
        %v1542 = vmax.f32 %v1534, 0.0
        %v1543 = vmax.f32 %v1536, 0.0
        %v1544 = vmax.f32 %v1538, 0.0
        %v1545 = vmax.f32 %v1540, 0.0
        %v1550 = vrot.slane %v1542, 4
        %v1551 = vrot.slane %v1543, 4
        %v1552 = vrot.slane %v1544, 4
        %v1553 = vsel %vm712, %v1550, %v1552
        %v1554 = vrot.slane %v1545, 4
        %v1555 = vsel %vm712, %v1551, %v1554
        %1562 = vst [vmem:[%s293 + $0x20] sm:$0xf0] %v1550
        %1563 = vst [vmem:[%s293 + $0x28] sm:$0xf0] %v1551
        %1564 = vst [vmem:[%s293 + $0x30] sm:$0xff] %v1553
        %1565 = vst [vmem:[%s293 + $0x38] sm:$0xff] %v1555
        %1566 = vst [vmem:[%s293 + $0x40] sm:$0xf] %v1552
        %1567 = vst [vmem:[%s293 + $0x48] sm:$0xf] %v1554
        %v1568 = vpack.c.bf16 %v1544, %v1542
        %v1569 = vpack.c.bf16 %v1545, %v1543
        %v1572 = vunpack.c.l.b16 %v1568
        %v1573 = vunpack.c.l.b16 %v1569
        %v1574 = vunpack.c.h.b16 %v1568
        %v1575 = vunpack.c.h.b16 %v1569
        %v1576 = vpack.c.b16 %v1573, %v1572
        %v1577 = vpack.c.b16 %v1575, %v1574
        %v1578 = vrot.slane %v1576, 6
        %v1579 = vrot.slane %v1578, 4
        %v1580 = vrot.slane %v1577, 6
        %v1581 = vsel %vm743, %v1579, %v1580
        %v1582 = vrot.slane %v1580, 4
        %1583 = vrot.lane.b32.xlu0 %v1578, 17
        %v1584 = vpop.permute.xlu0 %1583
        %1585 = vrot.lane.b32.xlu0 %v1581, 17
        %v1586 = vpop.permute.xlu0 %1585
        %1587 = vrot.lane.b32.xlu0 %v1582, 17
        %v1588 = vpop.permute.xlu0 %1587
        %v1589 = vrot.slane %v1584, 4
        %v1590 = vrot.slane %v1586, 4
        %v1591 = vrot.slane %v1588, 4
        %v1592 = vsel %vm340, %v1589, %v1584
        %v1593 = vsel %vm340, %v1590, %v1586
        %v1594 = vsel %vm340, %v1591, %v1588
        %1601 = vst.msk [vmem:[#allocation2 + $0x18] sm:$0xcc] %vm769, %v1592
        %1602 = vst.msk [vmem:[#allocation2 + $0x20] sm:$0xc] %vm771, %v1589
        %1603 = vst.msk [vmem:[#allocation2 + $0x24] sm:$0xff] %vm775, %v1593
        %1604 = vst.msk [vmem:[#allocation2 + $0x2c] sm:$0xf] %vm777, %v1590
        %1605 = vst.msk [vmem:[#allocation2 + $0x30] sm:$0x33] %vm346, %v1594
        %1606 = vst.msk [vmem:[#allocation2 + $0x38] sm:$0x3] %vm348, %v1591
        %v1607 = vld [vmem:[#allocation2 + $0x18] sm:$0xc]
        %v1608 = vld [vmem:[#allocation2 + $0x24] sm:$0xf]
        %v1609 = vld [vmem:[#allocation2 + $0x30] sm:$0x3]
        %1613 = vrot.lane.b32.xlu0 %v1607, 96
        %v1614 = vpop.permute.xlu0 %1613
        %1615 = vrot.lane.b32.xlu0 %v1608, 96
        %v1616 = vpop.permute.xlu0 %1615
        %1617 = vrot.lane.b32.xlu0 %v1609, 96
        %v1618 = vpop.permute.xlu0 %1617
        %1622 = vst.msk [vmem:[#allocation2 + $0x18] sm:$0xc] %vm796, %v1614
        %1623 = vst.msk [vmem:[#allocation2 + $0x24] sm:$0xf] %vm798, %v1616
        %1624 = vst.msk [vmem:[#allocation2 + $0x30] sm:$0x3] %vm355, %v1618
        %v1625 = vld [vmem:[#allocation2 + $0x1c] sm:$0xcc]
        %v1626 = vld [vmem:[#allocation2 + $0x28] sm:$0xff]
        %v1627 = vld [vmem:[#allocation2 + $0x34] sm:$0x33]
        %1631 = vrot.lane.b32.xlu0 %v1625, 32
        %v1632 = vpop.permute.xlu0 %1631
        %1633 = vrot.lane.b32.xlu0 %v1626, 32
        %v1634 = vpop.permute.xlu0 %1633
        %1635 = vrot.lane.b32.xlu0 %v1627, 32
        %v1636 = vpop.permute.xlu0 %1635
        %v1637 = vrot.slane %v1632, 4
        %v1638 = vrot.slane %v1634, 4
        %v1639 = vrot.slane %v1636, 4
        %v1640 = vsel %vm362, %v1632, %v1637
        %v1641 = vsel %vm362, %v1634, %v1638
        %v1642 = vsel %vm362, %v1636, %v1639
        %1646 = vst.msk [vmem:[#allocation2 + $0x20] sm:$0xc] %vm822, %v1640
        %1647 = vst.msk [vmem:[#allocation2 + $0x2c] sm:$0xf] %vm824, %v1641
        %1648 = vst.msk [vmem:[#allocation2 + $0x38] sm:$0x3] %vm365, %v1642
        %v1649 = vld [vmem:[#allocation2 + $0x18] sm:$0xcc]
        %v1650 = vld [vmem:[#allocation2 + $0x24] sm:$0xff]
        %v1651 = vld [vmem:[#allocation2 + $0x30] sm:$0x33]
        %v1652 = vld [vmem:[#allocation2 + $0x20] sm:$0xc]
        %v1653 = vld [vmem:[#allocation2 + $0x2c] sm:$0xf]
        %v1654 = vld [vmem:[#allocation2 + $0x38] sm:$0x3]
        %1658 = vrot.lane.b32.xlu0 %v1649, 2
        %v1659 = vpop.permute.xlu0 %1658
        %1660 = vrot.lane.b32.xlu0 %v1650, 2
        %v1661 = vpop.permute.xlu0 %1660
        %1662 = vrot.lane.b32.xlu0 %v1651, 2
        %v1663 = vpop.permute.xlu0 %1662
        %v1664 = vrot.slane %v1659, 4
        %v1665 = vrot.slane %v1661, 4
        %v1666 = vrot.slane %v1663, 4
        %v1667 = vsel %vm380, %v1664, %v1659
        %v1668 = vsel %vm380, %v1665, %v1661
        %v1669 = vsel %vm380, %v1666, %v1663
        %v1676 = vsel %vm382, %v1649, %v1667
        %v1677 = vsel %vm383, %v1652, %v1664
        %v1678 = vsel %vm382, %v1650, %v1668
        %v1679 = vsel %vm383, %v1653, %v1665
        %v1680 = vsel %vm382, %v1651, %v1669
        %v1681 = vsel %vm383, %v1654, %v1666
        %1688 = vrot.lane.b32.xlu0 %v1676, 126
        %v1689 = vpop.permute.xlu0 %1688
        %1690 = vrot.lane.b32.xlu0 %v1677, 126
        %v1691 = vpop.permute.xlu0 %1690
        %1692 = vrot.lane.b32.xlu0 %v1678, 126
        %v1693 = vpop.permute.xlu0 %1692
        %1694 = vrot.lane.b32.xlu0 %v1679, 126
        %v1695 = vpop.permute.xlu0 %1694
        %1696 = vrot.lane.b32.xlu0 %v1680, 126
        %v1697 = vpop.permute.xlu0 %1696
        %1698 = vrot.lane.b32.xlu0 %v1681, 126
        %v1699 = vpop.permute.xlu0 %1698
        %v1700 = vrot.slane %v1689, 4
        %v1701 = vrot.slane %v1691, 4
        %v1702 = vrot.slane %v1693, 4
        %v1703 = vrot.slane %v1695, 4
        %v1704 = vrot.slane %v1697, 4
        %v1705 = vrot.slane %v1699, 4
        %v1706 = vsel %vm401, %v1700, %v1701
        %v1707 = vsel %vm403, %v1689, %v1706
        %v1708 = vsel %vm401, %v1702, %v1703
        %v1709 = vsel %vm403, %v1693, %v1708
        %v1710 = vsel %vm401, %v1704, %v1705
        %v1711 = vsel %vm403, %v1697, %v1710
        %1715 = vst [vmem:[#allocation3 + $0xb0] sm:$0xcc] %v1707
        %1716 = vst [vmem:[#allocation3 + $0xb8] sm:$0xff] %v1709
        %1717 = vst [vmem:[#allocation3 + $0xc0] sm:$0x33] %v1711
        %1721 = vrot.lane.b32.xlu0 %v1649, 127
        %v1722 = vpop.permute.xlu0 %1721
        %1723 = vrot.lane.b32.xlu0 %v1652, 127
        %v1724 = vpop.permute.xlu0 %1723
        %1725 = vrot.lane.b32.xlu0 %v1650, 127
        %v1726 = vpop.permute.xlu0 %1725
        %1727 = vrot.lane.b32.xlu0 %v1653, 127
        %v1728 = vpop.permute.xlu0 %1727
        %1729 = vrot.lane.b32.xlu0 %v1651, 127
        %v1730 = vpop.permute.xlu0 %1729
        %1731 = vrot.lane.b32.xlu0 %v1654, 127
        %v1732 = vpop.permute.xlu0 %1731
        %v1733 = vrot.slane %v1722, 4
        %v1734 = vrot.slane %v1724, 4
        %v1735 = vrot.slane %v1726, 4
        %v1736 = vrot.slane %v1728, 4
        %v1737 = vrot.slane %v1730, 4
        %v1738 = vrot.slane %v1732, 4
        %v1739 = vsel %vm401, %v1733, %v1734
        %v1740 = vsel %vm417, %v1722, %v1739
        %v1741 = vsel %vm401, %v1735, %v1736
        %v1742 = vsel %vm417, %v1726, %v1741
        %v1743 = vsel %vm401, %v1737, %v1738
        %v1744 = vsel %vm417, %v1730, %v1743
        %1748 = vst [vmem:[#allocation3 + $0xc0] sm:$0xcc] %v1740
        %1749 = vst [vmem:[#allocation3 + $0xc8] sm:$0xff] %v1742
        %1750 = vst [vmem:[#allocation3 + $0xd0] sm:$0x33] %v1744
        %1751 = vrot.lane.b32.xlu0 %v1649, 126
        %v1752 = vpop.permute.xlu0 %1751
        %1753 = vrot.lane.b32.xlu0 %v1652, 126
        %v1754 = vpop.permute.xlu0 %1753
        %1755 = vrot.lane.b32.xlu0 %v1650, 126
        %v1756 = vpop.permute.xlu0 %1755
        %1757 = vrot.lane.b32.xlu0 %v1653, 126
        %v1758 = vpop.permute.xlu0 %1757
        %1759 = vrot.lane.b32.xlu0 %v1651, 126
        %v1760 = vpop.permute.xlu0 %1759
        %1761 = vrot.lane.b32.xlu0 %v1654, 126
        %v1762 = vpop.permute.xlu0 %1761
        %v1763 = vrot.slane %v1752, 4
        %v1764 = vrot.slane %v1754, 4
        %v1765 = vrot.slane %v1756, 4
        %v1766 = vrot.slane %v1758, 4
        %v1767 = vrot.slane %v1760, 4
        %v1768 = vrot.slane %v1762, 4
        %v1769 = vsel %vm401, %v1763, %v1764
        %v1770 = vsel %vm403, %v1752, %v1769
        %v1771 = vsel %vm401, %v1765, %v1766
        %v1772 = vsel %vm403, %v1756, %v1771
        %v1773 = vsel %vm401, %v1767, %v1768
        %v1774 = vsel %vm403, %v1760, %v1773
        %v1778 = vsel %vm427, %v1649, %v1770
        %v1779 = vsel %vm427, %v1650, %v1772
        %v1780 = vsel %vm427, %v1651, %v1774
        %1781 = vst [vmem:[#allocation3 + $0xd0] sm:$0xcc] %v1778
        %1782 = vst [vmem:[#allocation3 + $0xd8] sm:$0xff] %v1779
        %1783 = vst [vmem:[#allocation3 + $0xe0] sm:$0x33] %v1780
        %v1784 = vld [vmem:[#allocation2 + $0x18] sm:$0xcc]
        %v1785 = vld [vmem:[#allocation2 + $0x20] sm:$0xc]
        %v1786 = vld [vmem:[#allocation2 + $0x24] sm:$0xff]
        %v1787 = vld [vmem:[#allocation2 + $0x2c] sm:$0xf]
        %v1788 = vld [vmem:[#allocation2 + $0x30] sm:$0x33]
        %v1789 = vld [vmem:[#allocation2 + $0x38] sm:$0x3]
        %1796 = vrot.lane.b32.xlu0 %v1784, 2
        %v1797 = vpop.permute.xlu0 %1796
        %1798 = vrot.lane.b32.xlu0 %v1785, 2
        %v1799 = vpop.permute.xlu0 %1798
        %1800 = vrot.lane.b32.xlu0 %v1786, 2
        %v1801 = vpop.permute.xlu0 %1800
        %1802 = vrot.lane.b32.xlu0 %v1787, 2
        %v1803 = vpop.permute.xlu0 %1802
        %1804 = vrot.lane.b32.xlu0 %v1788, 2
        %v1805 = vpop.permute.xlu0 %1804
        %1806 = vrot.lane.b32.xlu0 %v1789, 2
        %v1807 = vpop.permute.xlu0 %1806
        %v1808 = vrot.slane %v1797, 4
        %v1809 = vrot.slane %v1801, 4
        %v1810 = vrot.slane %v1805, 4
        %v1811 = vsel %vm380, %v1808, %v1797
        %v1812 = vsel %vm380, %v1808, %v1799
        %v1813 = vsel %vm380, %v1809, %v1801
        %v1814 = vsel %vm380, %v1809, %v1803
        %v1815 = vsel %vm380, %v1810, %v1805
        %v1816 = vsel %vm380, %v1810, %v1807
        %v1823 = vsel %vm446, %v1784, %v1811
        %v1824 = vsel %vm447, %v1785, %v1812
        %v1825 = vsel %vm446, %v1786, %v1813
        %v1826 = vsel %vm447, %v1787, %v1814
        %v1827 = vsel %vm446, %v1788, %v1815
        %v1828 = vsel %vm447, %v1789, %v1816
        %1835 = vrot.lane.b32.xlu0 %v1823, 110
        %v1836 = vpop.permute.xlu0 %1835
        %1837 = vrot.lane.b32.xlu0 %v1824, 110
        %v1838 = vpop.permute.xlu0 %1837
        %1839 = vrot.lane.b32.xlu0 %v1825, 110
        %v1840 = vpop.permute.xlu0 %1839
        %1841 = vrot.lane.b32.xlu0 %v1826, 110
        %v1842 = vpop.permute.xlu0 %1841
        %1843 = vrot.lane.b32.xlu0 %v1827, 110
        %v1844 = vpop.permute.xlu0 %1843
        %1845 = vrot.lane.b32.xlu0 %v1828, 110
        %v1846 = vpop.permute.xlu0 %1845
        %v1847 = vrot.slane %v1836, 4
        %v1848 = vrot.slane %v1838, 4
        %v1849 = vrot.slane %v1840, 4
        %v1850 = vrot.slane %v1842, 4
        %v1851 = vrot.slane %v1844, 4
        %v1852 = vrot.slane %v1846, 4
        %v1853 = vsel %vm401, %v1847, %v1848
        %v1854 = vsel %vm472, %v1836, %v1853
        %v1855 = vsel %vm401, %v1849, %v1850
        %v1856 = vsel %vm472, %v1840, %v1855
        %v1857 = vsel %vm401, %v1851, %v1852
        %v1858 = vsel %vm472, %v1844, %v1857
        %1862 = vst [vmem:[#allocation3 + $0xe0] sm:$0xcc] %v1854
        %1863 = vst [vmem:[#allocation3 + $0xe8] sm:$0xff] %v1856
        %1864 = vst [vmem:[#allocation3 + $0xf0] sm:$0x33] %v1858
        %1865 = vrot.lane.b32.xlu0 %v1784, 111
        %v1866 = vpop.permute.xlu0 %1865
        %1867 = vrot.lane.b32.xlu0 %v1785, 111
        %v1868 = vpop.permute.xlu0 %1867
        %1869 = vrot.lane.b32.xlu0 %v1786, 111
        %v1870 = vpop.permute.xlu0 %1869
        %1871 = vrot.lane.b32.xlu0 %v1787, 111
        %v1872 = vpop.permute.xlu0 %1871
        %1873 = vrot.lane.b32.xlu0 %v1788, 111
        %v1874 = vpop.permute.xlu0 %1873
        %1875 = vrot.lane.b32.xlu0 %v1789, 111
        %v1876 = vpop.permute.xlu0 %1875
        %v1877 = vrot.slane %v1866, 4
        %v1878 = vrot.slane %v1868, 4
        %v1879 = vrot.slane %v1870, 4
        %v1880 = vrot.slane %v1872, 4
        %v1881 = vrot.slane %v1874, 4
        %v1882 = vrot.slane %v1876, 4
        %v1883 = vsel %vm401, %v1877, %v1878
        %v1884 = vsel %vm483, %v1866, %v1883
        %v1885 = vsel %vm401, %v1879, %v1880
        %v1886 = vsel %vm483, %v1870, %v1885
        %v1887 = vsel %vm401, %v1881, %v1882
        %v1888 = vsel %vm483, %v1874, %v1887
        %1892 = vst [vmem:[#allocation3 + $0xf0] sm:$0xcc] %v1884
        %1893 = vst [vmem:[#allocation3 + $0xf8] sm:$0xff] %v1886
        %1894 = vst [vmem:[#allocation3 + $0x100] sm:$0x33] %v1888
        %1895 = vrot.lane.b32.xlu0 %v1784, 126
        %v1896 = vpop.permute.xlu0 %1895
        %1897 = vrot.lane.b32.xlu0 %v1785, 126
        %v1898 = vpop.permute.xlu0 %1897
        %1899 = vrot.lane.b32.xlu0 %v1786, 126
        %v1900 = vpop.permute.xlu0 %1899
        %1901 = vrot.lane.b32.xlu0 %v1787, 126
        %v1902 = vpop.permute.xlu0 %1901
        %1903 = vrot.lane.b32.xlu0 %v1788, 126
        %v1904 = vpop.permute.xlu0 %1903
        %1905 = vrot.lane.b32.xlu0 %v1789, 126
        %v1906 = vpop.permute.xlu0 %1905
        %v1907 = vrot.slane %v1896, 4
        %v1908 = vrot.slane %v1898, 4
        %v1909 = vrot.slane %v1900, 4
        %v1910 = vrot.slane %v1902, 4
        %v1911 = vrot.slane %v1904, 4
        %v1912 = vrot.slane %v1906, 4
        %v1913 = vsel %vm401, %v1907, %v1908
        %v1914 = vsel %vm403, %v1896, %v1913
        %v1915 = vsel %vm401, %v1909, %v1910
        %v1916 = vsel %vm403, %v1900, %v1915
        %v1917 = vsel %vm401, %v1911, %v1912
        %v1918 = vsel %vm403, %v1904, %v1917
        %v1925 = vsel %vm493, %v1784, %v1914
        %v1926 = vsel %vm494, %v1785, %v1898
        %v1927 = vsel %vm493, %v1786, %v1916
        %v1928 = vsel %vm494, %v1787, %v1902
        %v1929 = vsel %vm493, %v1788, %v1918
        %v1930 = vsel %vm494, %v1789, %v1906
        %1937 = vrot.lane.b32.xlu0 %v1925, 112
        %v1938 = vpop.permute.xlu0 %1937
        %1939 = vrot.lane.b32.xlu0 %v1926, 112
        %v1940 = vpop.permute.xlu0 %1939
        %1941 = vrot.lane.b32.xlu0 %v1927, 112
        %v1942 = vpop.permute.xlu0 %1941
        %1943 = vrot.lane.b32.xlu0 %v1928, 112
        %v1944 = vpop.permute.xlu0 %1943
        %1945 = vrot.lane.b32.xlu0 %v1929, 112
        %v1946 = vpop.permute.xlu0 %1945
        %1947 = vrot.lane.b32.xlu0 %v1930, 112
        %v1948 = vpop.permute.xlu0 %1947
        %v1949 = vrot.slane %v1938, 4
        %v1950 = vrot.slane %v1940, 4
        %v1951 = vrot.slane %v1942, 4
        %v1952 = vrot.slane %v1944, 4
        %v1953 = vrot.slane %v1946, 4
        %v1954 = vrot.slane %v1948, 4
        %v1955 = vsel %vm401, %v1949, %v1950
        %v1956 = vsel %vm518, %v1938, %v1955
        %v1957 = vsel %vm401, %v1951, %v1952
        %v1958 = vsel %vm518, %v1942, %v1957
        %v1959 = vsel %vm401, %v1953, %v1954
        %v1960 = vsel %vm518, %v1946, %v1959
        %1964 = vst [vmem:[#allocation3 + $0x100] sm:$0xcc] %v1956
        %1965 = vst [vmem:[#allocation3 + $0x108] sm:$0xff] %v1958
        %1966 = vst [vmem:[#allocation3 + $0x110] sm:$0x33] %v1960
        %v1967 = vld [vmem:[#allocation2 + $0x18] sm:$0xcc]
        %v1968 = vld [vmem:[#allocation2 + $0x20] sm:$0xc]
        %v1969 = vld [vmem:[#allocation2 + $0x24] sm:$0xff]
        %v1970 = vld [vmem:[#allocation2 + $0x2c] sm:$0xf]
        %v1971 = vld [vmem:[#allocation2 + $0x30] sm:$0x33]
        %v1972 = vld [vmem:[#allocation2 + $0x38] sm:$0x3]
        %1979 = vrot.lane.b32.xlu0 %v1967, 2
        %v1980 = vpop.permute.xlu0 %1979
        %1981 = vrot.lane.b32.xlu0 %v1968, 2
        %v1982 = vpop.permute.xlu0 %1981
        %1983 = vrot.lane.b32.xlu0 %v1969, 2
        %v1984 = vpop.permute.xlu0 %1983
        %1985 = vrot.lane.b32.xlu0 %v1970, 2
        %v1986 = vpop.permute.xlu0 %1985
        %1987 = vrot.lane.b32.xlu0 %v1971, 2
        %v1988 = vpop.permute.xlu0 %1987
        %1989 = vrot.lane.b32.xlu0 %v1972, 2
        %v1990 = vpop.permute.xlu0 %1989
        %v1991 = vrot.slane %v1980, 4
        %v1992 = vrot.slane %v1984, 4
        %v1993 = vrot.slane %v1988, 4
        %v1994 = vsel %vm380, %v1991, %v1980
        %v1995 = vsel %vm380, %v1991, %v1982
        %v1996 = vsel %vm380, %v1992, %v1984
        %v1997 = vsel %vm380, %v1992, %v1986
        %v1998 = vsel %vm380, %v1993, %v1988
        %v1999 = vsel %vm380, %v1993, %v1990
        %v2006 = vsel %vm529, %v1967, %v1994
        %v2007 = vsel %vm530, %v1968, %v1995
        %v2008 = vsel %vm529, %v1969, %v1996
        %v2009 = vsel %vm530, %v1970, %v1997
        %v2010 = vsel %vm529, %v1971, %v1998
        %v2011 = vsel %vm530, %v1972, %v1999
        %2018 = vrot.lane.b32.xlu0 %v2006, 94
        %v2019 = vpop.permute.xlu0 %2018
        %2020 = vrot.lane.b32.xlu0 %v2007, 94
        %v2021 = vpop.permute.xlu0 %2020
        %2022 = vrot.lane.b32.xlu0 %v2008, 94
        %v2023 = vpop.permute.xlu0 %2022
        %2024 = vrot.lane.b32.xlu0 %v2009, 94
        %v2025 = vpop.permute.xlu0 %2024
        %2026 = vrot.lane.b32.xlu0 %v2010, 94
        %v2027 = vpop.permute.xlu0 %2026
        %2028 = vrot.lane.b32.xlu0 %v2011, 94
        %v2029 = vpop.permute.xlu0 %2028
        %v2030 = vrot.slane %v2019, 4
        %v2031 = vrot.slane %v2021, 4
        %v2032 = vrot.slane %v2023, 4
        %v2033 = vrot.slane %v2025, 4
        %v2034 = vrot.slane %v2027, 4
        %v2035 = vrot.slane %v2029, 4
        %v2036 = vsel %vm401, %v2030, %v2031
        %v2037 = vsel %vm553, %v2019, %v2036
        %v2038 = vsel %vm401, %v2032, %v2033
        %v2039 = vsel %vm553, %v2023, %v2038
        %v2040 = vsel %vm401, %v2034, %v2035
        %v2041 = vsel %vm553, %v2027, %v2040
        %2045 = vst [vmem:[#allocation3 + $0x110] sm:$0xcc] %v2037
        %2046 = vst [vmem:[#allocation3 + $0x118] sm:$0xff] %v2039
        %2047 = vst [vmem:[#allocation3 + $0x120] sm:$0x33] %v2041
        %2048 = vrot.lane.b32.xlu0 %v1967, 95
        %v2049 = vpop.permute.xlu0 %2048
        %2050 = vrot.lane.b32.xlu0 %v1968, 95
        %v2051 = vpop.permute.xlu0 %2050
        %2052 = vrot.lane.b32.xlu0 %v1969, 95
        %v2053 = vpop.permute.xlu0 %2052
        %2054 = vrot.lane.b32.xlu0 %v1970, 95
        %v2055 = vpop.permute.xlu0 %2054
        %2056 = vrot.lane.b32.xlu0 %v1971, 95
        %v2057 = vpop.permute.xlu0 %2056
        %2058 = vrot.lane.b32.xlu0 %v1972, 95
        %v2059 = vpop.permute.xlu0 %2058
        %v2060 = vrot.slane %v2049, 4
        %v2061 = vrot.slane %v2051, 4
        %v2062 = vrot.slane %v2053, 4
        %v2063 = vrot.slane %v2055, 4
        %v2064 = vrot.slane %v2057, 4
        %v2065 = vrot.slane %v2059, 4
        %v2066 = vsel %vm401, %v2060, %v2061
        %v2067 = vsel %vm566, %v2049, %v2066
        %v2068 = vsel %vm401, %v2062, %v2063
        %v2069 = vsel %vm566, %v2053, %v2068
        %v2070 = vsel %vm401, %v2064, %v2065
        %v2071 = vsel %vm566, %v2057, %v2070
        %2075 = vst [vmem:[#allocation3 + $0x120] sm:$0xcc] %v2067
        %2076 = vst [vmem:[#allocation3 + $0x128] sm:$0xff] %v2069
        %2077 = vst [vmem:[#allocation3 + $0x130] sm:$0x33] %v2071
        %2078 = vrot.lane.b32.xlu0 %v1967, 126
        %v2079 = vpop.permute.xlu0 %2078
        %2080 = vrot.lane.b32.xlu0 %v1968, 126
        %v2081 = vpop.permute.xlu0 %2080
        %2082 = vrot.lane.b32.xlu0 %v1969, 126
        %v2083 = vpop.permute.xlu0 %2082
        %2084 = vrot.lane.b32.xlu0 %v1970, 126
        %v2085 = vpop.permute.xlu0 %2084
        %2086 = vrot.lane.b32.xlu0 %v1971, 126
        %v2087 = vpop.permute.xlu0 %2086
        %2088 = vrot.lane.b32.xlu0 %v1972, 126
        %v2089 = vpop.permute.xlu0 %2088
        %v2090 = vrot.slane %v2079, 4
        %v2091 = vrot.slane %v2081, 4
        %v2092 = vrot.slane %v2083, 4
        %v2093 = vrot.slane %v2085, 4
        %v2094 = vrot.slane %v2087, 4
        %v2095 = vrot.slane %v2089, 4
        %v2096 = vsel %vm401, %v2090, %v2091
        %v2097 = vsel %vm403, %v2079, %v2096
        %v2098 = vsel %vm401, %v2092, %v2093
        %v2099 = vsel %vm403, %v2083, %v2098
        %v2100 = vsel %vm401, %v2094, %v2095
        %v2101 = vsel %vm403, %v2087, %v2100
        %v2108 = vsel %vm574, %v1967, %v2097
        %v2109 = vsel %vm575, %v1968, %v2081
        %v2110 = vsel %vm574, %v1969, %v2099
        %v2111 = vsel %vm575, %v1970, %v2085
        %v2112 = vsel %vm574, %v1971, %v2101
        %v2113 = vsel %vm575, %v1972, %v2089
        %2120 = vrot.lane.b32.xlu0 %v2108, 96
        %v2121 = vpop.permute.xlu0 %2120
        %2122 = vrot.lane.b32.xlu0 %v2109, 96
        %v2123 = vpop.permute.xlu0 %2122
        %2124 = vrot.lane.b32.xlu0 %v2110, 96
        %v2125 = vpop.permute.xlu0 %2124
        %2126 = vrot.lane.b32.xlu0 %v2111, 96
        %v2127 = vpop.permute.xlu0 %2126
        %2128 = vrot.lane.b32.xlu0 %v2112, 96
        %v2129 = vpop.permute.xlu0 %2128
        %2130 = vrot.lane.b32.xlu0 %v2113, 96
        %v2131 = vpop.permute.xlu0 %2130
        %v2132 = vrot.slane %v2121, 4
        %v2133 = vrot.slane %v2123, 4
        %v2134 = vrot.slane %v2125, 4
        %v2135 = vrot.slane %v2127, 4
        %v2136 = vrot.slane %v2129, 4
        %v2137 = vrot.slane %v2131, 4
        %v2138 = vsel %vm401, %v2132, %v2133
        %v2139 = vsel %vm597, %v2121, %v2138
        %v2140 = vsel %vm401, %v2134, %v2135
        %v2141 = vsel %vm597, %v2125, %v2140
        %v2142 = vsel %vm401, %v2136, %v2137
        %v2143 = vsel %vm597, %v2129, %v2142
        %2147 = vst [vmem:[#allocation3 + $0x130] sm:$0xcc] %v2139
        %2148 = vst [vmem:[#allocation3 + $0x138] sm:$0xff] %v2141
        %2149 = vst [vmem:[#allocation3 + $0x140] sm:$0x33] %v2143
        %v2150 = vld [vmem:[%s5] sm:$0xff]
        %v2151 = vld [vmem:[%s5 + $0x8] sm:$0xf]
        %v2152 = vld [vmem:[%s5 + $0xc] sm:$0xff]
        %v2153 = vld [vmem:[%s5 + $0x14] sm:$0xf]
        %v2154 = vld [vmem:[#allocation3] sm:$0xff]
        %v2155 = vld [vmem:[#allocation3 + $0x8] sm:$0xff]
        %v2156 = vld [vmem:[#allocation3 + $0x10] sm:$0xff]
        %v2157 = vld [vmem:[#allocation3 + $0x18] sm:$0xff]
        %v2158 = vld [vmem:[#allocation3 + $0x20] sm:$0xff]
        %v2159 = vld [vmem:[#allocation3 + $0x28] sm:$0xff]
        %v2160 = vld [vmem:[#allocation3 + $0x30] sm:$0xff]
        %v2161 = vld [vmem:[#allocation3 + $0x38] sm:$0xff]
        %v2162 = vld [vmem:[#allocation3 + $0x40] sm:$0xff]
        %v2163 = vld [vmem:[#allocation3 + $0x48] sm:$0xff]
        %v2164 = vld [vmem:[#allocation3 + $0x50] sm:$0xff]
        %v2165 = vld [vmem:[#allocation3 + $0x58] sm:$0xff]
        %v2166 = vld [vmem:[#allocation3 + $0x60] sm:$0xff]
        %v2167 = vld [vmem:[#allocation3 + $0x68] sm:$0xff]
        %v2168 = vld [vmem:[#allocation3 + $0x70] sm:$0xff]
        %v2169 = vld [vmem:[#allocation3 + $0x78] sm:$0xff]
        %v2170 = vld [vmem:[#allocation3 + $0x80] sm:$0xff]
        %v2171 = vld [vmem:[#allocation3 + $0x88] sm:$0xff]
        %v2172 = vld [vmem:[#allocation3 + $0x90] sm:$0xff]
        %v2173 = vld [vmem:[#allocation3 + $0x98] sm:$0xff]
        %v2174 = vld [vmem:[#allocation3 + $0xa0] sm:$0xff]
        %v2175 = vld [vmem:[#allocation3 + $0xa8] sm:$0xff]
        %v2176 = vld [vmem:[#allocation3 + $0xb0] sm:$0xff]
        %v2177 = vld [vmem:[#allocation3 + $0xb8] sm:$0xff]
        %v2178 = vld [vmem:[#allocation3 + $0xc0] sm:$0xff]
        %v2179 = vld [vmem:[#allocation3 + $0xc8] sm:$0xff]
        %v2180 = vld [vmem:[#allocation3 + $0xd0] sm:$0xff]
        %v2181 = vld [vmem:[#allocation3 + $0xd8] sm:$0xff]
        %v2182 = vld [vmem:[#allocation3 + $0xe0] sm:$0xff]
        %v2183 = vld [vmem:[#allocation3 + $0xe8] sm:$0xff]
        %v2184 = vld [vmem:[#allocation3 + $0xf0] sm:$0xff]
        %v2185 = vld [vmem:[#allocation3 + $0xf8] sm:$0xff]
        %v2186 = vld [vmem:[#allocation3 + $0x100] sm:$0xff]
        %v2187 = vld [vmem:[#allocation3 + $0x108] sm:$0xff]
        %v2188 = vld [vmem:[#allocation3 + $0x110] sm:$0xff]
        %v2189 = vld [vmem:[#allocation3 + $0x118] sm:$0xff]
        %v2190 = vld [vmem:[#allocation3 + $0x120] sm:$0xff]
        %v2191 = vld [vmem:[#allocation3 + $0x128] sm:$0xff]
        %v2192 = vld [vmem:[#allocation3 + $0x130] sm:$0xff]
        %v2193 = vld [vmem:[#allocation3 + $0x138] sm:$0xff]
        %v2194 = vld [vmem:[#allocation3 + $0x140] sm:$0x33]
        %v2195 = vld [vmem:[%s6] sm:$0xff]
        %v2196 = vld [vmem:[%s6 + $0x8] sm:$0xff]
        %2198 = vset.pattern.permute.xlu0 0
        %2199 = vperm.xlu0 %2198, %v2195
        %v2200 = vpop.permute.xlu0 %2199
        %2203 = vset.pattern.permute.xlu0 0
        %2204 = vperm.xlu0 %2203, %v2196
        %v2205 = vpop.permute.xlu0 %2204
        %v2211 = vunpack.c.l.b16 %v2150
        %v2212 = vunpack.c.h.b16 %v2150
        %v2213 = vunpack.c.l.b16 %v2151
        %v2214 = vunpack.c.l.b16 %v2152
        %v2215 = vunpack.c.h.b16 %v2152
        %v2216 = vunpack.c.l.b16 %v2153
        %v2217 = vpack.c.b16 %v2214, %v2211
        %v2218 = vpack.c.b16 %v2215, %v2212
        %v2219 = vpack.c.b16 %v2216, %v2213
        %v2263 = vunpack.c.l.b16 %v2154
        %v2264 = vunpack.c.h.b16 %v2154
        %v2265 = vunpack.c.l.b16 %v2155
        %v2266 = vunpack.c.h.b16 %v2155
        %v2267 = vunpack.c.l.b16 %v2156
        %v2268 = vunpack.c.h.b16 %v2156
        %v2269 = vunpack.c.l.b16 %v2157
        %v2270 = vunpack.c.h.b16 %v2157
        %v2271 = vunpack.c.l.b16 %v2158
        %v2272 = vunpack.c.h.b16 %v2158
        %v2273 = vunpack.c.l.b16 %v2159
        %v2274 = vunpack.c.h.b16 %v2159
        %v2275 = vunpack.c.l.b16 %v2160
        %v2276 = vunpack.c.h.b16 %v2160
        %v2277 = vunpack.c.l.b16 %v2161
        %v2278 = vunpack.c.h.b16 %v2161
        %v2279 = vunpack.c.l.b16 %v2162
        %v2280 = vunpack.c.h.b16 %v2162
        %v2281 = vunpack.c.l.b16 %v2163
        %v2282 = vunpack.c.h.b16 %v2163
        %v2283 = vunpack.c.l.b16 %v2164
        %v2284 = vunpack.c.h.b16 %v2164
        %v2285 = vunpack.c.l.b16 %v2165
        %v2286 = vunpack.c.h.b16 %v2165
        %v2287 = vunpack.c.l.b16 %v2166
        %v2288 = vunpack.c.h.b16 %v2166
        %v2289 = vunpack.c.l.b16 %v2167
        %v2290 = vunpack.c.h.b16 %v2167
        %v2291 = vunpack.c.l.b16 %v2168
        %v2292 = vunpack.c.h.b16 %v2168
        %v2293 = vunpack.c.l.b16 %v2169
        %v2294 = vunpack.c.h.b16 %v2169
        %v2295 = vunpack.c.l.b16 %v2170
        %v2296 = vunpack.c.h.b16 %v2170
        %v2297 = vunpack.c.l.b16 %v2171
        %v2298 = vunpack.c.h.b16 %v2171
        %v2299 = vunpack.c.l.b16 %v2172
        %v2300 = vunpack.c.h.b16 %v2172
        %v2301 = vunpack.c.l.b16 %v2173
        %v2302 = vunpack.c.h.b16 %v2173
        %v2303 = vunpack.c.l.b16 %v2174
        %v2304 = vunpack.c.h.b16 %v2174
        %v2305 = vunpack.c.l.b16 %v2175
        %v2306 = vunpack.c.h.b16 %v2175
        %v2307 = vunpack.c.l.b16 %v2176
        %v2308 = vunpack.c.h.b16 %v2176
        %v2309 = vunpack.c.l.b16 %v2177
        %v2310 = vunpack.c.h.b16 %v2177
        %v2311 = vunpack.c.l.b16 %v2178
        %v2312 = vunpack.c.h.b16 %v2178
        %v2313 = vunpack.c.l.b16 %v2179
        %v2314 = vunpack.c.h.b16 %v2179
        %v2315 = vunpack.c.l.b16 %v2180
        %v2316 = vunpack.c.h.b16 %v2180
        %v2317 = vunpack.c.l.b16 %v2181
        %v2318 = vunpack.c.h.b16 %v2181
        %v2319 = vunpack.c.l.b16 %v2182
        %v2320 = vunpack.c.h.b16 %v2182
        %v2321 = vunpack.c.l.b16 %v2183
        %v2322 = vunpack.c.h.b16 %v2183
        %v2323 = vunpack.c.l.b16 %v2184
        %v2324 = vunpack.c.h.b16 %v2184
        %v2325 = vunpack.c.l.b16 %v2185
        %v2326 = vunpack.c.h.b16 %v2185
        %v2327 = vunpack.c.l.b16 %v2186
        %v2328 = vunpack.c.h.b16 %v2186
        %v2329 = vunpack.c.l.b16 %v2187
        %v2330 = vunpack.c.h.b16 %v2187
        %v2331 = vunpack.c.l.b16 %v2188
        %v2332 = vunpack.c.h.b16 %v2188
        %v2333 = vunpack.c.l.b16 %v2189
        %v2334 = vunpack.c.h.b16 %v2189
        %v2335 = vunpack.c.l.b16 %v2190
        %v2336 = vunpack.c.h.b16 %v2190
        %v2337 = vunpack.c.l.b16 %v2191
        %v2338 = vunpack.c.h.b16 %v2191
        %v2339 = vunpack.c.l.b16 %v2192
        %v2340 = vunpack.c.h.b16 %v2192
        %v2341 = vunpack.c.l.b16 %v2193
        %v2342 = vunpack.c.h.b16 %v2193
        %v2343 = vunpack.c.l.b16 %v2194
        %v2344 = vunpack.c.h.b16 %v2194
        %v2345 = vpack.c.b16 %v2265, %v2263
        %v2346 = vpack.c.b16 %v2266, %v2264
        %v2347 = vpack.c.b16 %v2269, %v2267
        %v2348 = vpack.c.b16 %v2270, %v2268
        %v2349 = vpack.c.b16 %v2273, %v2271
        %v2350 = vpack.c.b16 %v2274, %v2272
        %v2351 = vpack.c.b16 %v2277, %v2275
        %v2352 = vpack.c.b16 %v2278, %v2276
        %v2353 = vpack.c.b16 %v2281, %v2279
        %v2354 = vpack.c.b16 %v2282, %v2280
        %v2355 = vpack.c.b16 %v2285, %v2283
        %v2356 = vpack.c.b16 %v2286, %v2284
        %v2357 = vpack.c.b16 %v2289, %v2287
        %v2358 = vpack.c.b16 %v2290, %v2288
        %v2359 = vpack.c.b16 %v2293, %v2291
        %v2360 = vpack.c.b16 %v2294, %v2292
        %v2361 = vpack.c.b16 %v2297, %v2295
        %v2362 = vpack.c.b16 %v2298, %v2296
        %v2363 = vpack.c.b16 %v2301, %v2299
        %v2364 = vpack.c.b16 %v2302, %v2300
        %v2365 = vpack.c.b16 %v2305, %v2303
        %v2366 = vpack.c.b16 %v2306, %v2304
        %v2367 = vpack.c.b16 %v2309, %v2307
        %v2368 = vpack.c.b16 %v2310, %v2308
        %v2369 = vpack.c.b16 %v2313, %v2311
        %v2370 = vpack.c.b16 %v2314, %v2312
        %v2371 = vpack.c.b16 %v2317, %v2315
        %v2372 = vpack.c.b16 %v2318, %v2316
        %v2373 = vpack.c.b16 %v2321, %v2319
        %v2374 = vpack.c.b16 %v2322, %v2320
        %v2375 = vpack.c.b16 %v2325, %v2323
        %v2376 = vpack.c.b16 %v2326, %v2324
        %v2377 = vpack.c.b16 %v2329, %v2327
        %v2378 = vpack.c.b16 %v2330, %v2328
        %v2379 = vpack.c.b16 %v2333, %v2331
        %v2380 = vpack.c.b16 %v2334, %v2332
        %v2381 = vpack.c.b16 %v2337, %v2335
        %v2382 = vpack.c.b16 %v2338, %v2336
        %v2383 = vpack.c.b16 %v2341, %v2339
        %v2384 = vpack.c.b16 %v2342, %v2340
        %v2385 = vpack.c.b16 %v2343, %v2343
        %v2386 = vpack.c.b16 %v2344, %v2344
        %vm2427 = vcmask 556032
        %v2429 = vsel %vm2427, %v2219, 0
        %v2432 = vsel %vm654, %v2385, 0
        %v2435 = vsel %vm654, %v2386, 0
        %2437 = vmatprep.subr.bf16.mxu0 %v2360
        %2438 = vmatpush1.bf16.msra.mxu0 %v2359
        %2439 = vmatprep.subr.bf16.mxu0 %v2358
        %2440 = vmatpush1.bf16.msra.mxu0 %v2357
        %2441 = vmatprep.subr.bf16.mxu0 %v2356
        %2442 = vmatpush1.bf16.msra.mxu0 %v2355
        %2443 = vmatprep.subr.bf16.mxu0 %v2354
        %2444 = vmatpush1.bf16.msra.mxu0 %v2353
        %2445 = vmatprep.subr.bf16.mxu0 %v2352
        %2446 = vmatpush1.bf16.msra.mxu0 %v2351
        %2447 = vmatprep.subr.bf16.mxu0 %v2350
        %2448 = vmatpush1.bf16.msra.mxu0 %v2349
        %2449 = vmatprep.subr.bf16.mxu0 %v2348
        %2450 = vmatpush1.bf16.msra.mxu0 %v2347
        %2451 = vmatprep.subr.bf16.mxu0 %v2346
        %2452 = vmatpush1.bf16.msra.mxu0 %v2345
        %2453 = vmatprep.subr.bf16.mxu0 %v2376
        %2454 = vmatpush2.bf16.msra.mxu0 %v2375
        %2455 = vmatprep.subr.bf16.mxu0 %v2374
        %2456 = vmatpush2.bf16.msra.mxu0 %v2373
        %2457 = vmatprep.subr.bf16.mxu0 %v2372
        %2458 = vmatpush2.bf16.msra.mxu0 %v2371
        %2459 = vmatprep.subr.bf16.mxu0 %v2370
        %2460 = vmatpush2.bf16.msra.mxu0 %v2369
        %2461 = vmatprep.subr.bf16.mxu0 %v2368
        %2462 = vmatpush2.bf16.msra.mxu0 %v2367
        %2463 = vmatprep.subr.bf16.mxu0 %v2366
        %2464 = vmatpush2.bf16.msra.mxu0 %v2365
        %2465 = vmatprep.subr.bf16.mxu0 %v2364
        %2466 = vmatpush2.bf16.msra.mxu0 %v2363
        %2467 = vmatprep.subr.bf16.mxu0 %v2362
        %2468 = vmatpush2.bf16.msra.mxu0 %v2361
        %2469 = vmatprep.mubr.bf16.mxu0 %v2218
        %2470 = vmatmul.mubr.bf16.gmra.mxu0 %v2217
        %v2471 = vpop.f32.mrf.mxu0
        %v2472 = vadd.f32 %v2200, %v2471
        %v2473 = vpop.f32.mrf.mxu0
        %v2474 = vadd.f32 %v2200, %v2473
        %v2475 = vpop.f32.mrf.mxu0
        %v2476 = vadd.f32 %v2205, %v2475
        %v2477 = vpop.f32.mrf.mxu0
        %v2478 = vadd.f32 %v2205, %v2477
        %2479 = vdwg.mxu0
        %2480 = vmatprep.subr.bf16.mxu0 0
        %2481 = vmatpush1.bf16.msra.mxu0 0
        %2482 = vmatprep.subr.bf16.mxu0 0
        %2483 = vmatpush1.bf16.msra.mxu0 0
        %2484 = vmatprep.subr.bf16.mxu0 0
        %2485 = vmatpush1.bf16.msra.mxu0 0
        %2486 = vmatprep.subr.bf16.mxu0 %v2435
        %2487 = vmatpush1.bf16.msra.mxu0 %v2432
        %2488 = vmatprep.subr.bf16.mxu0 %v2384
        %2489 = vmatpush1.bf16.msra.mxu0 %v2383
        %2490 = vmatprep.subr.bf16.mxu0 %v2382
        %2491 = vmatpush1.bf16.msra.mxu0 %v2381
        %2492 = vmatprep.subr.bf16.mxu0 %v2380
        %2493 = vmatpush1.bf16.msra.mxu0 %v2379
        %2494 = vmatprep.subr.bf16.mxu0 %v2378
        %2495 = vmatpush1.bf16.msra.mxu0 %v2377
        %2496 = vmatprep.subr.bf16.mxu0 0
        %2497 = vmatpush2.bf16.msra.mxu0 0
        %2498 = vmatprep.subr.bf16.mxu0 0
        %2499 = vmatpush2.bf16.msra.mxu0 0
        %2500 = vmatprep.subr.bf16.mxu0 0
        %2501 = vmatpush2.bf16.msra.mxu0 0
        %2502 = vmatprep.subr.bf16.mxu0 0
        %2503 = vmatpush2.bf16.msra.mxu0 0
        %2504 = vmatprep.subr.bf16.mxu0 0
        %2505 = vmatpush2.bf16.msra.mxu0 0
        %2506 = vmatprep.subr.bf16.mxu0 0
        %2507 = vmatpush2.bf16.msra.mxu0 0
        %2508 = vmatprep.subr.bf16.mxu0 0
        %2509 = vmatpush2.bf16.msra.mxu0 0
        %2510 = vmatprep.subr.bf16.mxu0 0
        %2511 = vmatpush2.bf16.msra.mxu0 0
        %2512 = vmatprep.mubr.bf16.mxu0 0
        %2513 = vmatmul.mubr.bf16.gmra.mxu0 %v2429
        %v2514 = vpop.f32.mrf.mxu0
        %v2515 = vadd.f32 %v2472, %v2514
        %v2516 = vpop.f32.mrf.mxu0
        %v2517 = vadd.f32 %v2474, %v2516
        %v2518 = vpop.f32.mrf.mxu0
        %v2519 = vadd.f32 %v2476, %v2518
        %v2520 = vpop.f32.mrf.mxu0
        %v2521 = vadd.f32 %v2478, %v2520
        %2522 = vdwg.mxu0
        %v2523 = vmax.f32 %v2515, 0.0
        %v2524 = vmax.f32 %v2517, 0.0
        %v2525 = vmax.f32 %v2519, 0.0
        %v2526 = vmax.f32 %v2521, 0.0
        %v2531 = vrot.slane %v2523, 4
        %v2532 = vrot.slane %v2524, 4
        %v2533 = vrot.slane %v2525, 4
        %v2534 = vsel %vm712, %v2531, %v2533
        %v2535 = vrot.slane %v2526, 4
        %v2536 = vsel %vm712, %v2532, %v2535
        %2543 = vst [vmem:[%s293 + $0x40] sm:$0xf0] %v2531
        %2544 = vst [vmem:[%s293 + $0x48] sm:$0xf0] %v2532
        %2545 = vst [vmem:[%s293 + $0x50] sm:$0xff] %v2534
        %2546 = vst [vmem:[%s293 + $0x58] sm:$0xff] %v2536
        %2547 = vst [vmem:[%s293 + $0x60] sm:$0xf] %v2533
        %2548 = vst [vmem:[%s293 + $0x68] sm:$0xf] %v2535
        %p2549 = scmp.lt.s32.totalorder %s19, 1
        %s2550 = scalar_select %p2549, %s19, 1
        %s2551 = smul.addr %s2550, 14
        %s2552 = smul.addr %s2551, 8
        %s2553 = scalar_lea.vmem %s7, %s2552
        // Predicated region
        $region53: #{tpu_custom_call.1} parent=47 // pred_check
          %p2554 = pneg %p189
        $region54: #{tpu_custom_call.1} parent=47 // pred_check_branch
          %2556 = sbr.rel (%p2554) target = $region56
        $region55: #{tpu_custom_call.1} parent=47 // pred_region
          _
        $region56: #{tpu_custom_call.1} parent=47 // pred_fallthru
          _
      $region48: #{tpu_custom_call.1} parent=5 // pred_fallthru
        _
      %p2557 = scmp.le.s32.totalorder 2, %s14
      // Predicated region
      $region57: #{tpu_custom_call.1} parent=5 // pred_check
        %p2558 = pneg %p2557
      $region58: #{tpu_custom_call.1} parent=5 // pred_check_branch
        %2560 = sbr.rel (%p2558) target = $region60
      $region59: #{tpu_custom_call.1} parent=5 // pred_region
        %s2561 = ssub.s32 %s14, 2
        // Predicated region
        $region61: #{tpu_custom_call.1} parent=59 // pred_check
          %p2562 = pneg %p195
        $region62: #{tpu_custom_call.1} parent=59 // pred_check_branch
          %2564 = sbr.rel (%p2562) target = $region64
        $region63: #{tpu_custom_call.1} parent=59 // pred_region
          %p2565 = scmp.lt.s32.totalorder %s20, 1
          %s2566 = scalar_select %p2565, %s20, 1
          %s2567 = smul.addr %s2566, 14
          %s2568 = smul.addr %s2567, 8
          %s2569 = scalar_lea.vmem %s7, %s2568
        $region64: #{tpu_custom_call.1} parent=59 // pred_fallthru
          _
      $region60: #{tpu_custom_call.1} parent=5 // pred_fallthru
        _
    $region6: #{tpu_custom_call.1} parent=1 // loop_footer
      %s18 = sadd.s32 1, %s14
    $region7: #{tpu_custom_call.1} parent=1 // loop_footer_branch
      %13 = sbr.rel target = $region3
    $region8: #{tpu_custom_call.1} parent=1 // loop_exit
      _
    %2570 = vsyncpa [#allocation5], 1
    %s2571 = scalar_lea.sflag [#allocation5], 1
    %2572 = vsyncpa %s2571, 1

</llo_original>
